<compile_context>
chip_gen: v7x
topology: tpu7x:2x2x1
jax: 0.10.0
libtpu: 0.0.40
codegen_flags: <defaults>
</compile_context>

<pallas_src>
import functools

import jax
import jax.numpy as jnp
from jax.experimental import pallas as pl
from jax.experimental.pallas import tpu as pltpu

EPS = 1e-5


def _cnn_block_kernel(x_ref, w1_ref, w2_ref, p_ref,
                      g1_ref, b1_ref, g2_ref, b2_ref,
                      o_ref, xpad_ref, mpad_ref, *, inv_count):
    """Fused conv3x3 + BatchNorm2d(train) + ReLU, twice.

    x_ref   : (N, H, W*Cin)        input, merged (w, c) lane layout, f32
    w*_ref  : (3, W*Cin, W*Cout)   per-kh block-banded conv weights, bf16
                                   (padding=1 along W folded into the band)
    p_ref   : (W*Cout, W*Cout)     channel-match matrix P[l,l'] = (chan(l)==chan(l'))
    g*/b*   : (1, W*Cout)          lane-tiled BN gamma / beta, f32
    o_ref   : (N, H, W*Cout)       lane-dense output, f32
    xpad_ref: (N, H+2, W*Cin)      VMEM scratch, H-zero-padded layer-1 input
    mpad_ref: (N, H+2, W*Cout)     VMEM scratch, H-zero-padded layer-1 output
    """
    N, H, _ = x_ref.shape
    WCout = o_ref.shape[-1]
    NH = N * H

    p_mat = p_ref[...]                                     # (WCout, WCout) f32

    def conv_bn_relu(pad_ref, w_ref, gamma_l, beta_l):
        seg = pad_ref.shape[-1]

        # --- conv: 3 accumulated MXU matmuls, one per kh row tap ------------
        # Operands cast to bf16; accumulation in f32. No im2col concat copy.
        acc = None
        for kh in range(3):
            tap = pad_ref[:, kh:kh + H, :].reshape(NH, seg).astype(jnp.bfloat16)
            part = jnp.dot(tap, w_ref[kh], preferred_element_type=jnp.float32)
            acc = part if acc is None else acc + part      # (NH, WCout) f32

        # --- BatchNorm2d (training mode): biased batch stats, all f32 -------
        # dot(colsum, P) performs the lane->channel sum and the channel->lane
        # broadcast in a single (1,WCout)x(WCout,WCout) matmul.
        colsum = jnp.sum(acc, axis=0, keepdims=True)                      # (1, WCout)
        mean_l = jnp.dot(colsum, p_mat,
                         preferred_element_type=jnp.float32) * inv_count  # (1, WCout)
        d = acc - mean_l
        sqsum = jnp.sum(d * d, axis=0, keepdims=True)                     # (1, WCout)
        var_l = jnp.dot(sqsum, p_mat,
                        preferred_element_type=jnp.float32) * inv_count   # (1, WCout)
        scale_l = gamma_l * jax.lax.rsqrt(var_l + EPS)

        # --- ReLU -----------------------------------------------------------
        return jnp.maximum(d * scale_l + beta_l, 0.0)                     # (NH, WCout)

    # Zero ONLY the two halo rows of each padded scratch; the interior is
    # written exactly once by the activation copies below.
    zx = jnp.zeros((N, 1, xpad_ref.shape[-1]), xpad_ref.dtype)
    xpad_ref[:, 0:1, :] = zx
    xpad_ref[:, H + 1:H + 2, :] = zx
    zm = jnp.zeros((N, 1, WCout), mpad_ref.dtype)
    mpad_ref[:, 0:1, :] = zm
    mpad_ref[:, H + 1:H + 2, :] = zm

    # ---------------- layer 1 (in-kernel H zero-padding) ----------------
    xpad_ref[:, 1:H + 1, :] = x_ref[...]
    y1 = conv_bn_relu(xpad_ref, w1_ref, g1_ref[...], b1_ref[...])

    # ---------------- layer 2 (intermediate never leaves VMEM) ----------
    mpad_ref[:, 1:H + 1, :] = y1.reshape(N, H, WCout)
    y2 = conv_bn_relu(mpad_ref, w2_ref, g2_ref[...], b2_ref[...])

    # Lane-dense store: minor dim is W*Cout (= 128 here).
    o_ref[...] = y2.reshape(N, H, WCout)


def _banded_conv_weight(w_oihw, W):
    """Fold an OIHW 3x3 kernel into per-kh block-banded matrices (3, W*Cin, W*Cout).

    Entry [kh, p*Cin + ci, w*Cout + co] = w[co, ci, kh, kw] when p == w + kw - 1
    and 0 otherwise.  The band structure encodes padding=1 along W, so the
    kernel only pads along H.  Returned in bf16 (MXU operand dtype).
    """
    Cout, Cin = w_oihw.shape[0], w_oihw.shape[1]
    w_hwio = jnp.transpose(w_oihw, (2, 3, 1, 0)).astype(jnp.float32)   # (3,3,Cin,Cout)
    banded = jnp.zeros((3, W, Cin, W, Cout), jnp.float32)
    for kw in range(3):
        shift = jnp.eye(W, W, k=1 - kw, dtype=jnp.float32)             # [p,w] = (p == w+kw-1)
        banded = banded + jnp.einsum('pq,hco->hpcqo', shift, w_hwio[:, kw])
    return banded.reshape(3, W * Cin, W * Cout).astype(jnp.bfloat16)


@jax.jit
def cnn_block_forward(x_nchw, conv_w1, conv_w2, g1, b1, g2, b2):
    """CNNBlock.forward(x, conv_w1, conv_w2); NCHW in / NCHW out (PyTorch convention)."""
    N, Cin, H, W = x_nchw.shape
    Cout = conv_w1.shape[0]

    # Pad Cin up to a multiple of 8 (zero channels / zero weight rows) so the
    # layer-1 merged lane width W*Cin is 128 -> lane-dense loads and taps.
    Cin_p = ((Cin + 7) // 8) * 8
    x_p = jnp.pad(x_nchw.astype(jnp.float32),
                  ((0, 0), (0, Cin_p - Cin), (0, 0), (0, 0)))
    w1_p = jnp.pad(conv_w1.astype(jnp.float32),
                   ((0, 0), (0, Cin_p - Cin), (0, 0), (0, 0)))

    # NCHW -> merged-lane NHWC: (N, H, W*Cin_p)
    x_m = jnp.transpose(x_p, (0, 2, 3, 1)).reshape(N, H, W * Cin_p)

    w1 = _banded_conv_weight(w1_p, W)                       # (3, W*Cin_p, W*Cout) bf16
    w2 = _banded_conv_weight(conv_w2, W)                    # (3, W*Cout,  W*Cout) bf16

    # Channel-match matrix for the BN lane reductions/broadcasts.
    e = jnp.tile(jnp.eye(Cout, dtype=jnp.float32), (1, W))  # (Cout, W*Cout)
    p_mat = e.T @ e                                         # (W*Cout, W*Cout)

    def lane(v):                                            # (Cout,) -> (1, W*Cout)
        return jnp.tile(v.reshape(1, Cout).astype(jnp.float32), (1, W))

    inv_count = 1.0 / float(N * H * W)
    kernel = functools.partial(_cnn_block_kernel, inv_count=inv_count)

    out = pl.pallas_call(
        kernel,
        out_shape=jax.ShapeDtypeStruct((N, H, W * Cout), jnp.float32),
        in_specs=[pl.BlockSpec(memory_space=pltpu.MemorySpace.VMEM)] * 8,
        out_specs=pl.BlockSpec(memory_space=pltpu.MemorySpace.VMEM),
        scratch_shapes=[
            pltpu.VMEM((N, H + 2, W * Cin_p), jnp.float32),  # H-padded layer-1 input
            pltpu.VMEM((N, H + 2, W * Cout), jnp.float32),   # H-padded layer-1 output
        ],
        compiler_params=pltpu.CompilerParams(vmem_limit_bytes=32 * 1024 * 1024),
    )(x_m, w1, w2, p_mat, lane(g1), lane(b1), lane(g2), lane(b2))

    # (N, H, W*Cout) -> NCHW
    return jnp.transpose(out.reshape(N, H, W, Cout), (0, 3, 1, 2))


def _reference(x_nchw, w1, w2, g1, b1, g2, b2):
    """Pure-JAX reference matching F.conv2d + training-mode BatchNorm2d + relu."""
    def conv(x, w):
        return jax.lax.conv_general_dilated(
            x, w, window_strides=(1, 1), padding=((1, 1), (1, 1)),
            dimension_numbers=("NCHW", "OIHW", "NCHW"))

    def bn_relu(x, g, b):
        mean = jnp.mean(x, axis=(0, 2, 3), keepdims=True)
        var = jnp.mean(jnp.square(x - mean), axis=(0, 2, 3), keepdims=True)
        y = (x - mean) * jax.lax.rsqrt(var + EPS)
        y = y * g.reshape(1, -1, 1, 1) + b.reshape(1, -1, 1, 1)
        return jnp.maximum(y, 0.0)

    o1 = bn_relu(conv(x_nchw, w1), g1, b1)
    return bn_relu(conv(o1, w2), g2, b2)


if __name__ == "__main__":
    # Small shapes consistent with the module: input_size=4, output_size=8.
    N, Cin, Cout, H, W = 2, 4, 8, 16, 16

    key = jax.random.PRNGKey(0)
    kx, kw1, kw2 = jax.random.split(key, 3)
    x = jax.random.normal(kx, (N, Cin, H, W), jnp.float32)                  # NCHW
    conv_w1 = jax.random.normal(kw1, (Cout, Cin, 3, 3), jnp.float32) * 0.1  # OIHW
    conv_w2 = jax.random.normal(kw2, (Cout, Cout, 3, 3), jnp.float32) * 0.1

    # BatchNorm2d default parameter init: gamma=1, beta=0.
    g1 = jnp.ones((Cout,), jnp.float32)
    b1 = jnp.zeros((Cout,), jnp.float32)
    g2 = jnp.ones((Cout,), jnp.float32)
    b2 = jnp.zeros((Cout,), jnp.float32)

    out = jax.block_until_ready(cnn_block_forward(x, conv_w1, conv_w2, g1, b1, g2, b2))

    ref = _reference(x, conv_w1, conv_w2, g1, b1, g2, b2)
    assert out.shape == (N, Cout, H, W)
    # bf16 MXU operands (f32 accumulation / BN math) vs. a pure-f32 reference.
    assert jnp.allclose(out, ref, atol=3e-2, rtol=3e-2), "mismatch vs reference"

    print("KERNEL_OK")
</pallas_src>

<mosaic_0001>
module attributes {stable_mosaic.version = 11 : i64} {
  func.func @_cnn_block_kernel(%arg0: memref<2x16x128xf32, #tpu.memory_space<vmem>>, %arg1: memref<3x128x128xbf16, #tpu.memory_space<vmem>>, %arg2: memref<3x128x128xbf16, #tpu.memory_space<vmem>>, %arg3: memref<128x128xf32, #tpu.memory_space<vmem>>, %arg4: memref<1x128xf32, #tpu.memory_space<vmem>>, %arg5: memref<1x128xf32, #tpu.memory_space<vmem>>, %arg6: memref<1x128xf32, #tpu.memory_space<vmem>>, %arg7: memref<1x128xf32, #tpu.memory_space<vmem>>, %arg8: memref<2x16x128xf32, #tpu.memory_space<vmem>>, %arg9: memref<2x18x128xf32, #tpu.memory_space<vmem>>, %arg10: memref<2x18x128xf32, #tpu.memory_space<vmem>>) attributes {dimension_semantics = [], scalar_prefetch = 0 : i64, scratch_operands = 2 : i64, tpu.core_type = #tpu.core_type<tc>} {
    %c0 = arith.constant 0 : index
    %c0_0 = arith.constant 0 : index
    %0 = vector.load %arg3[%c0, %c0_0] : memref<128x128xf32, #tpu.memory_space<vmem>>, vector<128x128xf32>
    %cst = arith.constant 0.000000e+00 : f32
    %1 = vector.broadcast %cst : f32 to vector<2x1x128xf32>
    %c0_1 = arith.constant 0 : index
    %c0_2 = arith.constant 0 : index
    %c0_3 = arith.constant 0 : index
    %2 = vector.load %arg9[%c0_1, %c0_2, %c0_3] : memref<2x18x128xf32, #tpu.memory_space<vmem>>, vector<2x1x128xf32>
    tpu.vector_store %arg9[%c0_1, %c0_2, %c0_3], %1 {strides = array<i32>} : memref<2x18x128xf32, #tpu.memory_space<vmem>>, vector<2x1x128xf32>,
    %c0_4 = arith.constant 0 : index
    %c17 = arith.constant 17 : index
    %c0_5 = arith.constant 0 : index
    %3 = vector.load %arg9[%c0_4, %c17, %c0_5] : memref<2x18x128xf32, #tpu.memory_space<vmem>>, vector<2x1x128xf32>
    tpu.vector_store %arg9[%c0_4, %c17, %c0_5], %1 {strides = array<i32>} : memref<2x18x128xf32, #tpu.memory_space<vmem>>, vector<2x1x128xf32>,
    %cst_6 = arith.constant 0.000000e+00 : f32
    %4 = vector.broadcast %cst_6 : f32 to vector<2x1x128xf32>
    %c0_7 = arith.constant 0 : index
    %c0_8 = arith.constant 0 : index
    %c0_9 = arith.constant 0 : index
    %5 = vector.load %arg10[%c0_7, %c0_8, %c0_9] : memref<2x18x128xf32, #tpu.memory_space<vmem>>, vector<2x1x128xf32>
    tpu.vector_store %arg10[%c0_7, %c0_8, %c0_9], %4 {strides = array<i32>} : memref<2x18x128xf32, #tpu.memory_space<vmem>>, vector<2x1x128xf32>,
    %c0_10 = arith.constant 0 : index
    %c17_11 = arith.constant 17 : index
    %c0_12 = arith.constant 0 : index
    %6 = vector.load %arg10[%c0_10, %c17_11, %c0_12] : memref<2x18x128xf32, #tpu.memory_space<vmem>>, vector<2x1x128xf32>
    tpu.vector_store %arg10[%c0_10, %c17_11, %c0_12], %4 {strides = array<i32>} : memref<2x18x128xf32, #tpu.memory_space<vmem>>, vector<2x1x128xf32>,
    %c0_13 = arith.constant 0 : index
    %c0_14 = arith.constant 0 : index
    %c0_15 = arith.constant 0 : index
    %7 = vector.load %arg0[%c0_13, %c0_14, %c0_15] : memref<2x16x128xf32, #tpu.memory_space<vmem>>, vector<2x16x128xf32>
    %c0_16 = arith.constant 0 : index
    %c1 = arith.constant 1 : index
    %c0_17 = arith.constant 0 : index
    %8 = vector.load %arg9[%c0_16, %c1, %c0_17] : memref<2x18x128xf32, #tpu.memory_space<vmem>>, vector<2x16x128xf32>
    tpu.vector_store %arg9[%c0_16, %c1, %c0_17], %7 {strides = array<i32>} : memref<2x18x128xf32, #tpu.memory_space<vmem>>, vector<2x16x128xf32>,
    %c0_18 = arith.constant 0 : index
    %c0_19 = arith.constant 0 : index
    %9 = vector.load %arg4[%c0_18, %c0_19] : memref<1x128xf32, #tpu.memory_space<vmem>>, vector<1x128xf32>
    %c0_20 = arith.constant 0 : index
    %c0_21 = arith.constant 0 : index
    %10 = vector.load %arg5[%c0_20, %c0_21] : memref<1x128xf32, #tpu.memory_space<vmem>>, vector<1x128xf32>
    %c0_22 = arith.constant 0 : index
    %c0_23 = arith.constant 0 : index
    %c0_24 = arith.constant 0 : index
    %11 = vector.load %arg9[%c0_22, %c0_23, %c0_24] : memref<2x18x128xf32, #tpu.memory_space<vmem>>, vector<2x16x128xf32>
    %12 = vector.shape_cast %11 : vector<2x16x128xf32> to vector<32x128xf32>
    %13 = arith.truncf %12 : vector<32x128xf32> to vector<32x128xbf16>
    %c0_25 = arith.constant 0 : index
    %c0_26 = arith.constant 0 : index
    %c0_27 = arith.constant 0 : index
    %14 = vector.load %arg1[%c0_25, %c0_26, %c0_27] : memref<3x128x128xbf16, #tpu.memory_space<vmem>>, vector<1x128x128xbf16>
    %15 = vector.shape_cast %14 : vector<1x128x128xbf16> to vector<128x128xbf16>
    %cst_28 = arith.constant dense<0.000000e+00> : vector<32x128xf32>
    %16 = tpu.matmul %13, %15, %cst_28 {dimension_numbers = #tpu.dot_dimension_numbers<[1], [0], [0], [1], [0, 0, 1, 1], [], []>} : vector<32x128xbf16>, vector<128x128xbf16>, vector<32x128xf32> -> vector<32x128xf32>
    %c0_29 = arith.constant 0 : index
    %c1_30 = arith.constant 1 : index
    %c0_31 = arith.constant 0 : index
    %17 = vector.load %arg9[%c0_29, %c1_30, %c0_31] : memref<2x18x128xf32, #tpu.memory_space<vmem>>, vector<2x16x128xf32>
    %18 = vector.shape_cast %17 : vector<2x16x128xf32> to vector<32x128xf32>
    %19 = arith.truncf %18 : vector<32x128xf32> to vector<32x128xbf16>
    %c1_32 = arith.constant 1 : index
    %c0_33 = arith.constant 0 : index
    %c0_34 = arith.constant 0 : index
    %20 = vector.load %arg1[%c1_32, %c0_33, %c0_34] : memref<3x128x128xbf16, #tpu.memory_space<vmem>>, vector<1x128x128xbf16>
    %21 = vector.shape_cast %20 : vector<1x128x128xbf16> to vector<128x128xbf16>
    %cst_35 = arith.constant dense<0.000000e+00> : vector<32x128xf32>
    %22 = tpu.matmul %19, %21, %cst_35 {dimension_numbers = #tpu.dot_dimension_numbers<[1], [0], [0], [1], [0, 0, 1, 1], [], []>} : vector<32x128xbf16>, vector<128x128xbf16>, vector<32x128xf32> -> vector<32x128xf32>
    %23 = arith.addf %16, %22 : vector<32x128xf32>
    %c0_36 = arith.constant 0 : index
    %c2 = arith.constant 2 : index
    %c0_37 = arith.constant 0 : index
    %24 = vector.load %arg9[%c0_36, %c2, %c0_37] : memref<2x18x128xf32, #tpu.memory_space<vmem>>, vector<2x16x128xf32>
    %25 = vector.shape_cast %24 : vector<2x16x128xf32> to vector<32x128xf32>
    %26 = arith.truncf %25 : vector<32x128xf32> to vector<32x128xbf16>
    %c2_38 = arith.constant 2 : index
    %c0_39 = arith.constant 0 : index
    %c0_40 = arith.constant 0 : index
    %27 = vector.load %arg1[%c2_38, %c0_39, %c0_40] : memref<3x128x128xbf16, #tpu.memory_space<vmem>>, vector<1x128x128xbf16>
    %28 = vector.shape_cast %27 : vector<1x128x128xbf16> to vector<128x128xbf16>
    %cst_41 = arith.constant dense<0.000000e+00> : vector<32x128xf32>
    %29 = tpu.matmul %26, %28, %cst_41 {dimension_numbers = #tpu.dot_dimension_numbers<[1], [0], [0], [1], [0, 0, 1, 1], [], []>} : vector<32x128xbf16>, vector<128x128xbf16>, vector<32x128xf32> -> vector<32x128xf32>
    %30 = arith.addf %23, %29 : vector<32x128xf32>
    %cst_42 = arith.constant dense<0.000000e+00> : vector<128xf32>
    %31 = vector.multi_reduction <add>, %30, %cst_42 [0] : vector<32x128xf32> to vector<128xf32>
    %32 = vector.shape_cast %31 : vector<128xf32> to vector<1x128xf32>
    %cst_43 = arith.constant dense<0.000000e+00> : vector<1x128xf32>
    %33 = tpu.matmul %32, %0, %cst_43 {dimension_numbers = #tpu.dot_dimension_numbers<[1], [0], [0], [1], [0, 0, 1, 1], [], []>} : vector<1x128xf32>, vector<128x128xf32>, vector<1x128xf32> -> vector<1x128xf32>
    %cst_44 = arith.constant 0.001953125 : f32
    %34 = vector.broadcast %cst_44 : f32 to vector<1x128xf32>
    %35 = arith.mulf %33, %34 : vector<1x128xf32>
    %36 = vector.broadcast %35 : vector<1x128xf32> to vector<32x128xf32>
    %37 = arith.subf %30, %36 : vector<32x128xf32>
    %38 = arith.mulf %37, %37 : vector<32x128xf32>
    %cst_45 = arith.constant dense<0.000000e+00> : vector<128xf32>
    %39 = vector.multi_reduction <add>, %38, %cst_45 [0] : vector<32x128xf32> to vector<128xf32>
    %40 = vector.shape_cast %39 : vector<128xf32> to vector<1x128xf32>
    %cst_46 = arith.constant dense<0.000000e+00> : vector<1x128xf32>
    %41 = tpu.matmul %40, %0, %cst_46 {dimension_numbers = #tpu.dot_dimension_numbers<[1], [0], [0], [1], [0, 0, 1, 1], [], []>} : vector<1x128xf32>, vector<128x128xf32>, vector<1x128xf32> -> vector<1x128xf32>
    %cst_47 = arith.constant 0.001953125 : f32
    %42 = vector.broadcast %cst_47 : f32 to vector<1x128xf32>
    %43 = arith.mulf %41, %42 : vector<1x128xf32>
    %cst_48 = arith.constant 9.99999974E-6 : f32
    %44 = vector.broadcast %cst_48 : f32 to vector<1x128xf32>
    %45 = arith.addf %43, %44 : vector<1x128xf32>
    %46 = math.rsqrt %45 : vector<1x128xf32>
    %47 = arith.mulf %9, %46 : vector<1x128xf32>
    %48 = vector.broadcast %47 : vector<1x128xf32> to vector<32x128xf32>
    %49 = arith.mulf %37, %48 : vector<32x128xf32>
    %50 = vector.broadcast %10 : vector<1x128xf32> to vector<32x128xf32>
    %51 = arith.addf %49, %50 : vector<32x128xf32>
    %cst_49 = arith.constant 0.000000e+00 : f32
    %52 = vector.broadcast %cst_49 : f32 to vector<32x128xf32>
    %53 = arith.maximumf %51, %52 : vector<32x128xf32>
    %54 = vector.shape_cast %53 : vector<32x128xf32> to vector<2x16x128xf32>
    %c0_50 = arith.constant 0 : index
    %c1_51 = arith.constant 1 : index
    %c0_52 = arith.constant 0 : index
    %55 = vector.load %arg10[%c0_50, %c1_51, %c0_52] : memref<2x18x128xf32, #tpu.memory_space<vmem>>, vector<2x16x128xf32>
    tpu.vector_store %arg10[%c0_50, %c1_51, %c0_52], %54 {strides = array<i32>} : memref<2x18x128xf32, #tpu.memory_space<vmem>>, vector<2x16x128xf32>,
    %c0_53 = arith.constant 0 : index
    %c0_54 = arith.constant 0 : index
    %56 = vector.load %arg6[%c0_53, %c0_54] : memref<1x128xf32, #tpu.memory_space<vmem>>, vector<1x128xf32>
    %c0_55 = arith.constant 0 : index
    %c0_56 = arith.constant 0 : index
    %57 = vector.load %arg7[%c0_55, %c0_56] : memref<1x128xf32, #tpu.memory_space<vmem>>, vector<1x128xf32>
    %c0_57 = arith.constant 0 : index
    %c0_58 = arith.constant 0 : index
    %c0_59 = arith.constant 0 : index
    %58 = vector.load %arg10[%c0_57, %c0_58, %c0_59] : memref<2x18x128xf32, #tpu.memory_space<vmem>>, vector<2x16x128xf32>
    %59 = vector.shape_cast %58 : vector<2x16x128xf32> to vector<32x128xf32>
    %60 = arith.truncf %59 : vector<32x128xf32> to vector<32x128xbf16>
    %c0_60 = arith.constant 0 : index
    %c0_61 = arith.constant 0 : index
    %c0_62 = arith.constant 0 : index
    %61 = vector.load %arg2[%c0_60, %c0_61, %c0_62] : memref<3x128x128xbf16, #tpu.memory_space<vmem>>, vector<1x128x128xbf16>
    %62 = vector.shape_cast %61 : vector<1x128x128xbf16> to vector<128x128xbf16>
    %cst_63 = arith.constant dense<0.000000e+00> : vector<32x128xf32>
    %63 = tpu.matmul %60, %62, %cst_63 {dimension_numbers = #tpu.dot_dimension_numbers<[1], [0], [0], [1], [0, 0, 1, 1], [], []>} : vector<32x128xbf16>, vector<128x128xbf16>, vector<32x128xf32> -> vector<32x128xf32>
    %c0_64 = arith.constant 0 : index
    %c1_65 = arith.constant 1 : index
    %c0_66 = arith.constant 0 : index
    %64 = vector.load %arg10[%c0_64, %c1_65, %c0_66] : memref<2x18x128xf32, #tpu.memory_space<vmem>>, vector<2x16x128xf32>
    %65 = vector.shape_cast %64 : vector<2x16x128xf32> to vector<32x128xf32>
    %66 = arith.truncf %65 : vector<32x128xf32> to vector<32x128xbf16>
    %c1_67 = arith.constant 1 : index
    %c0_68 = arith.constant 0 : index
    %c0_69 = arith.constant 0 : index
    %67 = vector.load %arg2[%c1_67, %c0_68, %c0_69] : memref<3x128x128xbf16, #tpu.memory_space<vmem>>, vector<1x128x128xbf16>
    %68 = vector.shape_cast %67 : vector<1x128x128xbf16> to vector<128x128xbf16>
    %cst_70 = arith.constant dense<0.000000e+00> : vector<32x128xf32>
    %69 = tpu.matmul %66, %68, %cst_70 {dimension_numbers = #tpu.dot_dimension_numbers<[1], [0], [0], [1], [0, 0, 1, 1], [], []>} : vector<32x128xbf16>, vector<128x128xbf16>, vector<32x128xf32> -> vector<32x128xf32>
    %70 = arith.addf %63, %69 : vector<32x128xf32>
    %c0_71 = arith.constant 0 : index
    %c2_72 = arith.constant 2 : index
    %c0_73 = arith.constant 0 : index
    %71 = vector.load %arg10[%c0_71, %c2_72, %c0_73] : memref<2x18x128xf32, #tpu.memory_space<vmem>>, vector<2x16x128xf32>
    %72 = vector.shape_cast %71 : vector<2x16x128xf32> to vector<32x128xf32>
    %73 = arith.truncf %72 : vector<32x128xf32> to vector<32x128xbf16>
    %c2_74 = arith.constant 2 : index
    %c0_75 = arith.constant 0 : index
    %c0_76 = arith.constant 0 : index
    %74 = vector.load %arg2[%c2_74, %c0_75, %c0_76] : memref<3x128x128xbf16, #tpu.memory_space<vmem>>, vector<1x128x128xbf16>
    %75 = vector.shape_cast %74 : vector<1x128x128xbf16> to vector<128x128xbf16>
    %cst_77 = arith.constant dense<0.000000e+00> : vector<32x128xf32>
    %76 = tpu.matmul %73, %75, %cst_77 {dimension_numbers = #tpu.dot_dimension_numbers<[1], [0], [0], [1], [0, 0, 1, 1], [], []>} : vector<32x128xbf16>, vector<128x128xbf16>, vector<32x128xf32> -> vector<32x128xf32>
    %77 = arith.addf %70, %76 : vector<32x128xf32>
    %cst_78 = arith.constant dense<0.000000e+00> : vector<128xf32>
    %78 = vector.multi_reduction <add>, %77, %cst_78 [0] : vector<32x128xf32> to vector<128xf32>
    %79 = vector.shape_cast %78 : vector<128xf32> to vector<1x128xf32>
    %cst_79 = arith.constant dense<0.000000e+00> : vector<1x128xf32>
    %80 = tpu.matmul %79, %0, %cst_79 {dimension_numbers = #tpu.dot_dimension_numbers<[1], [0], [0], [1], [0, 0, 1, 1], [], []>} : vector<1x128xf32>, vector<128x128xf32>, vector<1x128xf32> -> vector<1x128xf32>
    %cst_80 = arith.constant 0.001953125 : f32
    %81 = vector.broadcast %cst_80 : f32 to vector<1x128xf32>
    %82 = arith.mulf %80, %81 : vector<1x128xf32>
    %83 = vector.broadcast %82 : vector<1x128xf32> to vector<32x128xf32>
    %84 = arith.subf %77, %83 : vector<32x128xf32>
    %85 = arith.mulf %84, %84 : vector<32x128xf32>
    %cst_81 = arith.constant dense<0.000000e+00> : vector<128xf32>
    %86 = vector.multi_reduction <add>, %85, %cst_81 [0] : vector<32x128xf32> to vector<128xf32>
    %87 = vector.shape_cast %86 : vector<128xf32> to vector<1x128xf32>
    %cst_82 = arith.constant dense<0.000000e+00> : vector<1x128xf32>
    %88 = tpu.matmul %87, %0, %cst_82 {dimension_numbers = #tpu.dot_dimension_numbers<[1], [0], [0], [1], [0, 0, 1, 1], [], []>} : vector<1x128xf32>, vector<128x128xf32>, vector<1x128xf32> -> vector<1x128xf32>
    %cst_83 = arith.constant 0.001953125 : f32
    %89 = vector.broadcast %cst_83 : f32 to vector<1x128xf32>
    %90 = arith.mulf %88, %89 : vector<1x128xf32>
    %cst_84 = arith.constant 9.99999974E-6 : f32
    %91 = vector.broadcast %cst_84 : f32 to vector<1x128xf32>
    %92 = arith.addf %90, %91 : vector<1x128xf32>
    %93 = math.rsqrt %92 : vector<1x128xf32>
    %94 = arith.mulf %56, %93 : vector<1x128xf32>
    %95 = vector.broadcast %94 : vector<1x128xf32> to vector<32x128xf32>
    %96 = arith.mulf %84, %95 : vector<32x128xf32>
    %97 = vector.broadcast %57 : vector<1x128xf32> to vector<32x128xf32>
    %98 = arith.addf %96, %97 : vector<32x128xf32>
    %cst_85 = arith.constant 0.000000e+00 : f32
    %99 = vector.broadcast %cst_85 : f32 to vector<32x128xf32>
    %100 = arith.maximumf %98, %99 : vector<32x128xf32>
    %101 = vector.shape_cast %100 : vector<32x128xf32> to vector<2x16x128xf32>
    %c0_86 = arith.constant 0 : index
    %c0_87 = arith.constant 0 : index
    %c0_88 = arith.constant 0 : index
    %102 = vector.load %arg8[%c0_86, %c0_87, %c0_88] : memref<2x16x128xf32, #tpu.memory_space<vmem>>, vector<2x16x128xf32>
    tpu.vector_store %arg8[%c0_86, %c0_87, %c0_88], %101 {strides = array<i32>} : memref<2x16x128xf32, #tpu.memory_space<vmem>>, vector<2x16x128xf32>,
    return
  }
}

</mosaic_0001>

<llo_original>
// kernel: tile.25
$region0: #{tile.25}
  %s0 = inlined_call_operand.vmem [shape: bf16[8,16,8], index: 0, kind: input, shape index: {}]
  %s1 = inlined_call_operand.vmem [shape: bf16[8,128], index: 1, kind: output, shape index: {}]
  $region1: #{tile.25} parent=0
    #allocation0 [shape = 'u8[4096]{0}', space=vmem, size = 0x1000, scoped, tag = 'scoped mem for output reshape']
    #allocation1 [shape = 'u8[65536]{0}', space=vmem, size = 0x10000, scoped, tag = 'scoped mem for input reshape']
    %s3 = smul.u32 4, 2
    %s4 = sshllo.u32 0, %s3
    %s5 = smul.addr 4, 15
    %s6 = scalar_lea.vmem %s0, %s5
    %s7 = sshrl.u32 %s4, 1
    %s8 = sor.u32 %s4, %s7
    %s9 = sand.u32 %s8, 85
    %s10 = sshrl.u32 %s9, 1
    %s11 = sor.u32 %s9, %s10
    %s12 = sand.u32 51, %s11
    %s13 = sshrl.u32 %s12, 2
    %s14 = sor.u32 %s12, %s13
    %s15 = sand.u32 15, %s14
    %v16 = vld [vmem:[%s6] sm:%s15]
    %v17 = vunpack.c.l.bf16 %v16
    %v18 = vunpack.c.h.bf16 %v16
    %s19 = scalar_lea.vmem [#allocation1], 120
    %20 = vst [vmem:[%s19] sm:%s4] %v17
    %s21 = smul.addr 4, 14
    %s22 = scalar_lea.vmem %s0, %s21
    %s23 = sshrl.u32 %s4, 1
    %s24 = sor.u32 %s4, %s23
    %s25 = sand.u32 %s24, 85
    %s26 = sshrl.u32 %s25, 1
    %s27 = sor.u32 %s25, %s26
    %s28 = sand.u32 51, %s27
    %s29 = sshrl.u32 %s28, 2
    %s30 = sor.u32 %s28, %s29
    %s31 = sand.u32 15, %s30
    %v32 = vld [vmem:[%s22] sm:%s31]
    %v33 = vunpack.c.l.bf16 %v32
    %v34 = vunpack.c.h.bf16 %v32
    %s35 = scalar_lea.vmem [#allocation1], 112
    %36 = vst [vmem:[%s35] sm:%s4] %v33
    %s37 = smul.addr 4, 13
    %s38 = scalar_lea.vmem %s0, %s37
    %s39 = sshrl.u32 %s4, 1
    %s40 = sor.u32 %s4, %s39
    %s41 = sand.u32 %s40, 85
    %s42 = sshrl.u32 %s41, 1
    %s43 = sor.u32 %s41, %s42
    %s44 = sand.u32 51, %s43
    %s45 = sshrl.u32 %s44, 2
    %s46 = sor.u32 %s44, %s45
    %s47 = sand.u32 15, %s46
    %v48 = vld [vmem:[%s38] sm:%s47]
    %v49 = vunpack.c.l.bf16 %v48
    %v50 = vunpack.c.h.bf16 %v48
    %s51 = scalar_lea.vmem [#allocation1], 104
    %52 = vst [vmem:[%s51] sm:%s4] %v49
    %s53 = smul.addr 4, 12
    %s54 = scalar_lea.vmem %s0, %s53
    %s55 = sshrl.u32 %s4, 1
    %s56 = sor.u32 %s4, %s55
    %s57 = sand.u32 %s56, 85
    %s58 = sshrl.u32 %s57, 1
    %s59 = sor.u32 %s57, %s58
    %s60 = sand.u32 51, %s59
    %s61 = sshrl.u32 %s60, 2
    %s62 = sor.u32 %s60, %s61
    %s63 = sand.u32 15, %s62
    %v64 = vld [vmem:[%s54] sm:%s63]
    %v65 = vunpack.c.l.bf16 %v64
    %v66 = vunpack.c.h.bf16 %v64
    %s67 = scalar_lea.vmem [#allocation1], 96
    %68 = vst [vmem:[%s67] sm:%s4] %v65
    %s69 = smul.addr 4, 11
    %s70 = scalar_lea.vmem %s0, %s69
    %s71 = sshrl.u32 %s4, 1
    %s72 = sor.u32 %s4, %s71
    %s73 = sand.u32 %s72, 85
    %s74 = sshrl.u32 %s73, 1
    %s75 = sor.u32 %s73, %s74
    %s76 = sand.u32 51, %s75
    %s77 = sshrl.u32 %s76, 2
    %s78 = sor.u32 %s76, %s77
    %s79 = sand.u32 15, %s78
    %v80 = vld [vmem:[%s70] sm:%s79]
    %v81 = vunpack.c.l.bf16 %v80
    %v82 = vunpack.c.h.bf16 %v80
    %s83 = scalar_lea.vmem [#allocation1], 88
    %84 = vst [vmem:[%s83] sm:%s4] %v81
    %s85 = smul.addr 4, 10
    %s86 = scalar_lea.vmem %s0, %s85
    %s87 = sshrl.u32 %s4, 1
    %s88 = sor.u32 %s4, %s87
    %s89 = sand.u32 %s88, 85
    %s90 = sshrl.u32 %s89, 1
    %s91 = sor.u32 %s89, %s90
    %s92 = sand.u32 51, %s91
    %s93 = sshrl.u32 %s92, 2
    %s94 = sor.u32 %s92, %s93
    %s95 = sand.u32 15, %s94
    %v96 = vld [vmem:[%s86] sm:%s95]
    %v97 = vunpack.c.l.bf16 %v96
    %v98 = vunpack.c.h.bf16 %v96
    %s99 = scalar_lea.vmem [#allocation1], 80
    %100 = vst [vmem:[%s99] sm:%s4] %v97
    %s101 = smul.addr 4, 9
    %s102 = scalar_lea.vmem %s0, %s101
    %s103 = sshrl.u32 %s4, 1
    %s104 = sor.u32 %s4, %s103
    %s105 = sand.u32 %s104, 85
    %s106 = sshrl.u32 %s105, 1
    %s107 = sor.u32 %s105, %s106
    %s108 = sand.u32 51, %s107
    %s109 = sshrl.u32 %s108, 2
    %s110 = sor.u32 %s108, %s109
    %s111 = sand.u32 15, %s110
    %v112 = vld [vmem:[%s102] sm:%s111]
    %v113 = vunpack.c.l.bf16 %v112
    %v114 = vunpack.c.h.bf16 %v112
    %s115 = scalar_lea.vmem [#allocation1], 72
    %116 = vst [vmem:[%s115] sm:%s4] %v113
    %s117 = smul.addr 4, 8
    %s118 = scalar_lea.vmem %s0, %s117
    %s119 = sshrl.u32 %s4, 1
    %s120 = sor.u32 %s4, %s119
    %s121 = sand.u32 %s120, 85
    %s122 = sshrl.u32 %s121, 1
    %s123 = sor.u32 %s121, %s122
    %s124 = sand.u32 51, %s123
    %s125 = sshrl.u32 %s124, 2
    %s126 = sor.u32 %s124, %s125
    %s127 = sand.u32 15, %s126
    %v128 = vld [vmem:[%s118] sm:%s127]
    %v129 = vunpack.c.l.bf16 %v128
    %v130 = vunpack.c.h.bf16 %v128
    %s131 = scalar_lea.vmem [#allocation1], 64
    %132 = vst [vmem:[%s131] sm:%s4] %v129
    %s133 = smul.addr 4, 7
    %s134 = scalar_lea.vmem %s0, %s133
    %s135 = sshrl.u32 %s4, 1
    %s136 = sor.u32 %s4, %s135
    %s137 = sand.u32 %s136, 85
    %s138 = sshrl.u32 %s137, 1
    %s139 = sor.u32 %s137, %s138
    %s140 = sand.u32 51, %s139
    %s141 = sshrl.u32 %s140, 2
    %s142 = sor.u32 %s140, %s141
    %s143 = sand.u32 15, %s142
    %v144 = vld [vmem:[%s134] sm:%s143]
    %v145 = vunpack.c.l.bf16 %v144
    %v146 = vunpack.c.h.bf16 %v144
    %s147 = scalar_lea.vmem [#allocation1], 56
    %148 = vst [vmem:[%s147] sm:%s4] %v145
    %s149 = smul.addr 4, 6
    %s150 = scalar_lea.vmem %s0, %s149
    %s151 = sshrl.u32 %s4, 1
    %s152 = sor.u32 %s4, %s151
    %s153 = sand.u32 %s152, 85
    %s154 = sshrl.u32 %s153, 1
    %s155 = sor.u32 %s153, %s154
    %s156 = sand.u32 51, %s155
    %s157 = sshrl.u32 %s156, 2
    %s158 = sor.u32 %s156, %s157
    %s159 = sand.u32 15, %s158
    %v160 = vld [vmem:[%s150] sm:%s159]
    %v161 = vunpack.c.l.bf16 %v160
    %v162 = vunpack.c.h.bf16 %v160
    %s163 = scalar_lea.vmem [#allocation1], 48
    %164 = vst [vmem:[%s163] sm:%s4] %v161
    %s165 = smul.addr 4, 5
    %s166 = scalar_lea.vmem %s0, %s165
    %s167 = sshrl.u32 %s4, 1
    %s168 = sor.u32 %s4, %s167
    %s169 = sand.u32 %s168, 85
    %s170 = sshrl.u32 %s169, 1
    %s171 = sor.u32 %s169, %s170
    %s172 = sand.u32 51, %s171
    %s173 = sshrl.u32 %s172, 2
    %s174 = sor.u32 %s172, %s173
    %s175 = sand.u32 15, %s174
    %v176 = vld [vmem:[%s166] sm:%s175]
    %v177 = vunpack.c.l.bf16 %v176
    %v178 = vunpack.c.h.bf16 %v176
    %s179 = scalar_lea.vmem [#allocation1], 40
    %180 = vst [vmem:[%s179] sm:%s4] %v177
    %s181 = smul.addr 4, 4
    %s182 = scalar_lea.vmem %s0, %s181
    %s183 = sshrl.u32 %s4, 1
    %s184 = sor.u32 %s4, %s183
    %s185 = sand.u32 %s184, 85
    %s186 = sshrl.u32 %s185, 1
    %s187 = sor.u32 %s185, %s186
    %s188 = sand.u32 51, %s187
    %s189 = sshrl.u32 %s188, 2
    %s190 = sor.u32 %s188, %s189
    %s191 = sand.u32 15, %s190
    %v192 = vld [vmem:[%s182] sm:%s191]
    %v193 = vunpack.c.l.bf16 %v192
    %v194 = vunpack.c.h.bf16 %v192
    %s195 = scalar_lea.vmem [#allocation1], 32
    %196 = vst [vmem:[%s195] sm:%s4] %v193
    %s197 = smul.addr 4, 3
    %s198 = scalar_lea.vmem %s0, %s197
    %s199 = sshrl.u32 %s4, 1
    %s200 = sor.u32 %s4, %s199
    %s201 = sand.u32 %s200, 85
    %s202 = sshrl.u32 %s201, 1
    %s203 = sor.u32 %s201, %s202
    %s204 = sand.u32 51, %s203
    %s205 = sshrl.u32 %s204, 2
    %s206 = sor.u32 %s204, %s205
    %s207 = sand.u32 15, %s206
    %v208 = vld [vmem:[%s198] sm:%s207]
    %v209 = vunpack.c.l.bf16 %v208
    %v210 = vunpack.c.h.bf16 %v208
    %s211 = scalar_lea.vmem [#allocation1], 24
    %212 = vst [vmem:[%s211] sm:%s4] %v209
    %s213 = smul.addr 4, 2
    %s214 = scalar_lea.vmem %s0, %s213
    %s215 = sshrl.u32 %s4, 1
    %s216 = sor.u32 %s4, %s215
    %s217 = sand.u32 %s216, 85
    %s218 = sshrl.u32 %s217, 1
    %s219 = sor.u32 %s217, %s218
    %s220 = sand.u32 51, %s219
    %s221 = sshrl.u32 %s220, 2
    %s222 = sor.u32 %s220, %s221
    %s223 = sand.u32 15, %s222
    %v224 = vld [vmem:[%s214] sm:%s223]
    %v225 = vunpack.c.l.bf16 %v224
    %v226 = vunpack.c.h.bf16 %v224
    %s227 = scalar_lea.vmem [#allocation1], 16
    %228 = vst [vmem:[%s227] sm:%s4] %v225
    %s229 = scalar_lea.vmem %s0, 4
    %s230 = sshrl.u32 %s4, 1
    %s231 = sor.u32 %s4, %s230
    %s232 = sand.u32 %s231, 85
    %s233 = sshrl.u32 %s232, 1
    %s234 = sor.u32 %s232, %s233
    %s235 = sand.u32 51, %s234
    %s236 = sshrl.u32 %s235, 2
    %s237 = sor.u32 %s235, %s236
    %s238 = sand.u32 15, %s237
    %v239 = vld [vmem:[%s229] sm:%s238]
    %v240 = vunpack.c.l.bf16 %v239
    %v241 = vunpack.c.h.bf16 %v239
    %s242 = scalar_lea.vmem [#allocation1], 8
    %243 = vst [vmem:[%s242] sm:%s4] %v240
    %s244 = sshrl.u32 %s4, 1
    %s245 = sor.u32 %s4, %s244
    %s246 = sand.u32 %s245, 85
    %s247 = sshrl.u32 %s246, 1
    %s248 = sor.u32 %s246, %s247
    %s249 = sand.u32 51, %s248
    %s250 = sshrl.u32 %s249, 2
    %s251 = sor.u32 %s249, %s250
    %s252 = sand.u32 15, %s251
    %v253 = vld [vmem:[%s0] sm:%s252]
    %v254 = vunpack.c.l.bf16 %v253
    %v255 = vunpack.c.h.bf16 %v253
    %256 = vst [vmem:[#allocation1] sm:%s4] %v254
    %s257 = smov 3
    %v258 = vld [vmem:[#allocation1] ss:$16 sm:%s257]
    %s259 = smov 12
    %v260 = vld [vmem:[#allocation1] ss:$16 sm:%s259]
    %vm261 = vcmask 1043458
    %v262 = vsel %vm261, %v260, %v258
    %s263 = smov 48
    %v264 = vld [vmem:[#allocation1] ss:$16 sm:%s263]
    %vm265 = vcmask 1045508
    %v266 = vsel %vm265, %v264, %v262
    %s267 = smov 192
    %v268 = vld [vmem:[#allocation1] ss:$16 sm:%s267]
    %vm269 = vcmask 1047558
    %v270 = vsel %vm269, %v268, %v266
    %vm271 = vcmask 64512
    %272 = vst.msk [vmem:[#allocation0] sm:$0xff] %vm271, %v270
    %s273 = scalar_lea.vmem [#allocation1], 15
    %s274 = smov 3
    %v275 = vld [vmem:[%s273] ss:$16 sm:%s274]
    %s276 = scalar_lea.vmem [#allocation1], 15
    %s277 = smov 12
    %v278 = vld [vmem:[%s276] ss:$16 sm:%s277]
    %vm279 = vcmask 1043458
    %v280 = vsel %vm279, %v278, %v275
    %s281 = scalar_lea.vmem [#allocation1], 15
    %s282 = smov 48
    %v283 = vld [vmem:[%s281] ss:$16 sm:%s282]
    %vm284 = vcmask 1045508
    %v285 = vsel %vm284, %v283, %v280
    %s286 = scalar_lea.vmem [#allocation1], 15
    %s287 = smov 192
    %v288 = vld [vmem:[%s286] ss:$16 sm:%s287]
    %vm289 = vcmask 1047558
    %v290 = vsel %vm289, %v288, %v285
    %291 = vrot.lane.b32.xlu0 %v290, 120
    %v292 = vpop.permute.xlu0 %291
    %vm293 = vcmask 1048512
    %294 = vst.msk [vmem:[#allocation0] sm:$0xff] %vm293, %v292
    %s295 = scalar_lea.vmem [#allocation1], 14
    %s296 = smov 3
    %v297 = vld [vmem:[%s295] ss:$16 sm:%s296]
    %s298 = scalar_lea.vmem [#allocation1], 14
    %s299 = smov 12
    %v300 = vld [vmem:[%s298] ss:$16 sm:%s299]
    %vm301 = vcmask 1043458
    %v302 = vsel %vm301, %v300, %v297
    %s303 = scalar_lea.vmem [#allocation1], 14
    %s304 = smov 48
    %v305 = vld [vmem:[%s303] ss:$16 sm:%s304]
    %vm306 = vcmask 1045508
    %v307 = vsel %vm306, %v305, %v302
    %s308 = scalar_lea.vmem [#allocation1], 14
    %s309 = smov 192
    %v310 = vld [vmem:[%s308] ss:$16 sm:%s309]
    %vm311 = vcmask 1047558
    %v312 = vsel %vm311, %v310, %v307
    %313 = vrot.lane.b32.xlu0 %v312, 112
    %v314 = vpop.permute.xlu0 %313
    %vm315 = vcmask 982912
    %316 = vst.msk [vmem:[#allocation0] sm:$0xff] %vm315, %v314
    %s317 = scalar_lea.vmem [#allocation1], 13
    %s318 = smov 3
    %v319 = vld [vmem:[%s317] ss:$16 sm:%s318]
    %s320 = scalar_lea.vmem [#allocation1], 13
    %s321 = smov 12
    %v322 = vld [vmem:[%s320] ss:$16 sm:%s321]
    %vm323 = vcmask 1043458
    %v324 = vsel %vm323, %v322, %v319
    %s325 = scalar_lea.vmem [#allocation1], 13
    %s326 = smov 48
    %v327 = vld [vmem:[%s325] ss:$16 sm:%s326]
    %vm328 = vcmask 1045508
    %v329 = vsel %vm328, %v327, %v324
    %s330 = scalar_lea.vmem [#allocation1], 13
    %s331 = smov 192
    %v332 = vld [vmem:[%s330] ss:$16 sm:%s331]
    %vm333 = vcmask 1047558
    %v334 = vsel %vm333, %v332, %v329
    %335 = vrot.lane.b32.xlu0 %v334, 104
    %v336 = vpop.permute.xlu0 %335
    %vm337 = vcmask 917312
    %338 = vst.msk [vmem:[#allocation0] sm:$0xff] %vm337, %v336
    %s339 = scalar_lea.vmem [#allocation1], 12
    %s340 = smov 3
    %v341 = vld [vmem:[%s339] ss:$16 sm:%s340]
    %s342 = scalar_lea.vmem [#allocation1], 12
    %s343 = smov 12
    %v344 = vld [vmem:[%s342] ss:$16 sm:%s343]
    %vm345 = vcmask 1043458
    %v346 = vsel %vm345, %v344, %v341
    %s347 = scalar_lea.vmem [#allocation1], 12
    %s348 = smov 48
    %v349 = vld [vmem:[%s347] ss:$16 sm:%s348]
    %vm350 = vcmask 1045508
    %v351 = vsel %vm350, %v349, %v346
    %s352 = scalar_lea.vmem [#allocation1], 12
    %s353 = smov 192
    %v354 = vld [vmem:[%s352] ss:$16 sm:%s353]
    %vm355 = vcmask 1047558
    %v356 = vsel %vm355, %v354, %v351
    %357 = vrot.lane.b32.xlu0 %v356, 96
    %v358 = vpop.permute.xlu0 %357
    %vm359 = vcmask 851712
    %360 = vst.msk [vmem:[#allocation0] sm:$0xff] %vm359, %v358
    %s361 = scalar_lea.vmem [#allocation1], 11
    %s362 = smov 3
    %v363 = vld [vmem:[%s361] ss:$16 sm:%s362]
    %s364 = scalar_lea.vmem [#allocation1], 11
    %s365 = smov 12
    %v366 = vld [vmem:[%s364] ss:$16 sm:%s365]
    %vm367 = vcmask 1043458
    %v368 = vsel %vm367, %v366, %v363
    %s369 = scalar_lea.vmem [#allocation1], 11
    %s370 = smov 48
    %v371 = vld [vmem:[%s369] ss:$16 sm:%s370]
    %vm372 = vcmask 1045508
    %v373 = vsel %vm372, %v371, %v368
    %s374 = scalar_lea.vmem [#allocation1], 11
    %s375 = smov 192
    %v376 = vld [vmem:[%s374] ss:$16 sm:%s375]
    %vm377 = vcmask 1047558
    %v378 = vsel %vm377, %v376, %v373
    %379 = vrot.lane.b32.xlu0 %v378, 88
    %v380 = vpop.permute.xlu0 %379
    %vm381 = vcmask 786112
    %382 = vst.msk [vmem:[#allocation0] sm:$0xff] %vm381, %v380
    %s383 = scalar_lea.vmem [#allocation1], 10
    %s384 = smov 3
    %v385 = vld [vmem:[%s383] ss:$16 sm:%s384]
    %s386 = scalar_lea.vmem [#allocation1], 10
    %s387 = smov 12
    %v388 = vld [vmem:[%s386] ss:$16 sm:%s387]
    %vm389 = vcmask 1043458
    %v390 = vsel %vm389, %v388, %v385
    %s391 = scalar_lea.vmem [#allocation1], 10
    %s392 = smov 48
    %v393 = vld [vmem:[%s391] ss:$16 sm:%s392]
    %vm394 = vcmask 1045508
    %v395 = vsel %vm394, %v393, %v390
    %s396 = scalar_lea.vmem [#allocation1], 10
    %s397 = smov 192
    %v398 = vld [vmem:[%s396] ss:$16 sm:%s397]
    %vm399 = vcmask 1047558
    %v400 = vsel %vm399, %v398, %v395
    %401 = vrot.lane.b32.xlu0 %v400, 80
    %v402 = vpop.permute.xlu0 %401
    %vm403 = vcmask 720512
    %404 = vst.msk [vmem:[#allocation0] sm:$0xff] %vm403, %v402
    %s405 = scalar_lea.vmem [#allocation1], 9
    %s406 = smov 3
    %v407 = vld [vmem:[%s405] ss:$16 sm:%s406]
    %s408 = scalar_lea.vmem [#allocation1], 9
    %s409 = smov 12
    %v410 = vld [vmem:[%s408] ss:$16 sm:%s409]
    %vm411 = vcmask 1043458
    %v412 = vsel %vm411, %v410, %v407
    %s413 = scalar_lea.vmem [#allocation1], 9
    %s414 = smov 48
    %v415 = vld [vmem:[%s413] ss:$16 sm:%s414]
    %vm416 = vcmask 1045508
    %v417 = vsel %vm416, %v415, %v412
    %s418 = scalar_lea.vmem [#allocation1], 9
    %s419 = smov 192
    %v420 = vld [vmem:[%s418] ss:$16 sm:%s419]
    %vm421 = vcmask 1047558
    %v422 = vsel %vm421, %v420, %v417
    %423 = vrot.lane.b32.xlu0 %v422, 72
    %v424 = vpop.permute.xlu0 %423
    %vm425 = vcmask 654912
    %426 = vst.msk [vmem:[#allocation0] sm:$0xff] %vm425, %v424
    %s427 = scalar_lea.vmem [#allocation1], 8
    %s428 = smov 3
    %v429 = vld [vmem:[%s427] ss:$16 sm:%s428]
    %s430 = scalar_lea.vmem [#allocation1], 8
    %s431 = smov 12
    %v432 = vld [vmem:[%s430] ss:$16 sm:%s431]
    %vm433 = vcmask 1043458
    %v434 = vsel %vm433, %v432, %v429
    %s435 = scalar_lea.vmem [#allocation1], 8
    %s436 = smov 48
    %v437 = vld [vmem:[%s435] ss:$16 sm:%s436]
    %vm438 = vcmask 1045508
    %v439 = vsel %vm438, %v437, %v434
    %s440 = scalar_lea.vmem [#allocation1], 8
    %s441 = smov 192
    %v442 = vld [vmem:[%s440] ss:$16 sm:%s441]
    %vm443 = vcmask 1047558
    %v444 = vsel %vm443, %v442, %v439
    %445 = vrot.lane.b32.xlu0 %v444, 64
    %v446 = vpop.permute.xlu0 %445
    %vm447 = vcmask 589312
    %448 = vst.msk [vmem:[#allocation0] sm:$0xff] %vm447, %v446
    %s449 = scalar_lea.vmem [#allocation1], 7
    %s450 = smov 3
    %v451 = vld [vmem:[%s449] ss:$16 sm:%s450]
    %s452 = scalar_lea.vmem [#allocation1], 7
    %s453 = smov 12
    %v454 = vld [vmem:[%s452] ss:$16 sm:%s453]
    %vm455 = vcmask 1043458
    %v456 = vsel %vm455, %v454, %v451
    %s457 = scalar_lea.vmem [#allocation1], 7
    %s458 = smov 48
    %v459 = vld [vmem:[%s457] ss:$16 sm:%s458]
    %vm460 = vcmask 1045508
    %v461 = vsel %vm460, %v459, %v456
    %s462 = scalar_lea.vmem [#allocation1], 7
    %s463 = smov 192
    %v464 = vld [vmem:[%s462] ss:$16 sm:%s463]
    %vm465 = vcmask 1047558
    %v466 = vsel %vm465, %v464, %v461
    %467 = vrot.lane.b32.xlu0 %v466, 56
    %v468 = vpop.permute.xlu0 %467
    %vm469 = vcmask 523712
    %470 = vst.msk [vmem:[#allocation0] sm:$0xff] %vm469, %v468
    %s471 = scalar_lea.vmem [#allocation1], 6
    %s472 = smov 3
    %v473 = vld [vmem:[%s471] ss:$16 sm:%s472]
    %s474 = scalar_lea.vmem [#allocation1], 6
    %s475 = smov 12
    %v476 = vld [vmem:[%s474] ss:$16 sm:%s475]
    %vm477 = vcmask 1043458
    %v478 = vsel %vm477, %v476, %v473
    %s479 = scalar_lea.vmem [#allocation1], 6
    %s480 = smov 48
    %v481 = vld [vmem:[%s479] ss:$16 sm:%s480]
    %vm482 = vcmask 1045508
    %v483 = vsel %vm482, %v481, %v478
    %s484 = scalar_lea.vmem [#allocation1], 6
    %s485 = smov 192
    %v486 = vld [vmem:[%s484] ss:$16 sm:%s485]
    %vm487 = vcmask 1047558
    %v488 = vsel %vm487, %v486, %v483
    %489 = vrot.lane.b32.xlu0 %v488, 48
    %v490 = vpop.permute.xlu0 %489
    %vm491 = vcmask 458112
    %492 = vst.msk [vmem:[#allocation0] sm:$0xff] %vm491, %v490
    %s493 = scalar_lea.vmem [#allocation1], 5
    %s494 = smov 3
    %v495 = vld [vmem:[%s493] ss:$16 sm:%s494]
    %s496 = scalar_lea.vmem [#allocation1], 5
    %s497 = smov 12
    %v498 = vld [vmem:[%s496] ss:$16 sm:%s497]
    %vm499 = vcmask 1043458
    %v500 = vsel %vm499, %v498, %v495
    %s501 = scalar_lea.vmem [#allocation1], 5
    %s502 = smov 48
    %v503 = vld [vmem:[%s501] ss:$16 sm:%s502]
    %vm504 = vcmask 1045508
    %v505 = vsel %vm504, %v503, %v500
    %s506 = scalar_lea.vmem [#allocation1], 5
    %s507 = smov 192
    %v508 = vld [vmem:[%s506] ss:$16 sm:%s507]
    %vm509 = vcmask 1047558
    %v510 = vsel %vm509, %v508, %v505
    %511 = vrot.lane.b32.xlu0 %v510, 40
    %v512 = vpop.permute.xlu0 %511
    %vm513 = vcmask 392512
    %514 = vst.msk [vmem:[#allocation0] sm:$0xff] %vm513, %v512
    %s515 = scalar_lea.vmem [#allocation1], 4
    %s516 = smov 3
    %v517 = vld [vmem:[%s515] ss:$16 sm:%s516]
    %s518 = scalar_lea.vmem [#allocation1], 4
    %s519 = smov 12
    %v520 = vld [vmem:[%s518] ss:$16 sm:%s519]
    %vm521 = vcmask 1043458
    %v522 = vsel %vm521, %v520, %v517
    %s523 = scalar_lea.vmem [#allocation1], 4
    %s524 = smov 48
    %v525 = vld [vmem:[%s523] ss:$16 sm:%s524]
    %vm526 = vcmask 1045508
    %v527 = vsel %vm526, %v525, %v522
    %s528 = scalar_lea.vmem [#allocation1], 4
    %s529 = smov 192
    %v530 = vld [vmem:[%s528] ss:$16 sm:%s529]
    %vm531 = vcmask 1047558
    %v532 = vsel %vm531, %v530, %v527
    %533 = vrot.lane.b32.xlu0 %v532, 32
    %v534 = vpop.permute.xlu0 %533
    %vm535 = vcmask 326912
    %536 = vst.msk [vmem:[#allocation0] sm:$0xff] %vm535, %v534
    %s537 = scalar_lea.vmem [#allocation1], 3
    %s538 = smov 3
    %v539 = vld [vmem:[%s537] ss:$16 sm:%s538]
    %s540 = scalar_lea.vmem [#allocation1], 3
    %s541 = smov 12
    %v542 = vld [vmem:[%s540] ss:$16 sm:%s541]
    %vm543 = vcmask 1043458
    %v544 = vsel %vm543, %v542, %v539
    %s545 = scalar_lea.vmem [#allocation1], 3
    %s546 = smov 48
    %v547 = vld [vmem:[%s545] ss:$16 sm:%s546]
    %vm548 = vcmask 1045508
    %v549 = vsel %vm548, %v547, %v544
    %s550 = scalar_lea.vmem [#allocation1], 3
    %s551 = smov 192
    %v552 = vld [vmem:[%s550] ss:$16 sm:%s551]
    %vm553 = vcmask 1047558
    %v554 = vsel %vm553, %v552, %v549
    %555 = vrot.lane.b32.xlu0 %v554, 24
    %v556 = vpop.permute.xlu0 %555
    %vm557 = vcmask 261312
    %558 = vst.msk [vmem:[#allocation0] sm:$0xff] %vm557, %v556
    %s559 = scalar_lea.vmem [#allocation1], 2
    %s560 = smov 3
    %v561 = vld [vmem:[%s559] ss:$16 sm:%s560]
    %s562 = scalar_lea.vmem [#allocation1], 2
    %s563 = smov 12
    %v564 = vld [vmem:[%s562] ss:$16 sm:%s563]
    %vm565 = vcmask 1043458
    %v566 = vsel %vm565, %v564, %v561
    %s567 = scalar_lea.vmem [#allocation1], 2
    %s568 = smov 48
    %v569 = vld [vmem:[%s567] ss:$16 sm:%s568]
    %vm570 = vcmask 1045508
    %v571 = vsel %vm570, %v569, %v566
    %s572 = scalar_lea.vmem [#allocation1], 2
    %s573 = smov 192
    %v574 = vld [vmem:[%s572] ss:$16 sm:%s573]
    %vm575 = vcmask 1047558
    %v576 = vsel %vm575, %v574, %v571
    %577 = vrot.lane.b32.xlu0 %v576, 16
    %v578 = vpop.permute.xlu0 %577
    %vm579 = vcmask 195712
    %580 = vst.msk [vmem:[#allocation0] sm:$0xff] %vm579, %v578
    %s581 = scalar_lea.vmem [#allocation1], 1
    %s582 = smov 3
    %v583 = vld [vmem:[%s581] ss:$16 sm:%s582]
    %s584 = scalar_lea.vmem [#allocation1], 1
    %s585 = smov 12
    %v586 = vld [vmem:[%s584] ss:$16 sm:%s585]
    %vm587 = vcmask 1043458
    %v588 = vsel %vm587, %v586, %v583
    %s589 = scalar_lea.vmem [#allocation1], 1
    %s590 = smov 48
    %v591 = vld [vmem:[%s589] ss:$16 sm:%s590]
    %vm592 = vcmask 1045508
    %v593 = vsel %vm592, %v591, %v588
    %s594 = scalar_lea.vmem [#allocation1], 1
    %s595 = smov 192
    %v596 = vld [vmem:[%s594] ss:$16 sm:%s595]
    %vm597 = vcmask 1047558
    %v598 = vsel %vm597, %v596, %v593
    %599 = vrot.lane.b32.xlu0 %v598, 8
    %v600 = vpop.permute.xlu0 %599
    %vm601 = vcmask 130112
    %602 = vst.msk [vmem:[#allocation0] sm:$0xff] %vm601, %v600
    %s604 = smul.u32 4, 2
    %s605 = sshllo.u32 0, %s604
    %s606 = sshrl.u32 %s604, 1
    %v607 = vld [vmem:[#allocation0] sm:%s605]
    %v608 = vpack.c.bf16 0.0, %v607
    %s609 = sshllo.u32 0, %s606
    %610 = vst [vmem:[%s1] sm:%s609] %v608

// kernel: cnn_block_forward.1
$region0: #{cnn_block_forward.1}
  #allocation0 [shape = 'u32[]', space=smem, size = 0x4, offset = 0x4, fixed_abs, tag = 'smem constant byte address 0x4 - core index']
  #allocation1 [shape = 'u32[144,128]{1,0:T(1,128)}', space=vmem, size = 0x12000, scoped, tag = 'internal scratch']
  #allocation2 [shape = 'f32[2,18,128]{2,1,0:T(8,128)}', space=vmem, size = 0x6000, scoped, tag = 'scratch operand']
  #allocation3 [shape = 'f32[2,18,128]{2,1,0:T(8,128)}', space=vmem, size = 0x6000, scoped, tag = 'scratch operand']
  %s0 = inlined_call_operand.vmem [shape: f32[2,16,128], index: 0, kind: input, shape index: {}]
  %s1 = inlined_call_operand.vmem [shape: bf16[3,128,128], index: 1, kind: input, shape index: {}]
  %s2 = inlined_call_operand.vmem [shape: bf16[3,128,128], index: 2, kind: input, shape index: {}]
  %s3 = inlined_call_operand.vmem [shape: f32[128,128], index: 3, kind: input, shape index: {}]
  %s4 = inlined_call_operand.vmem [shape: f32[1,128], index: 4, kind: input, shape index: {}]
  %s5 = inlined_call_operand.vmem [shape: f32[1,128], index: 5, kind: input, shape index: {}]
  %s6 = inlined_call_operand.vmem [shape: f32[1,128], index: 6, kind: input, shape index: {}]
  %s7 = inlined_call_operand.vmem [shape: f32[1,128], index: 7, kind: input, shape index: {}]
  %s8 = inlined_call_operand.vmem [shape: f32[2,16,128], index: 8, kind: output, shape index: {}]
  %s9 = sld [smem:[#allocation0]]
  $region42: #{cnn_block_forward.1} parent=0
    _
  %s11 = ssub.s32 1, %s9
  %s12 = scalar_select 0, %s11, %s9
  // Predicated region
  $region2: #{cnn_block_forward.1} parent=0 // pred_check
    _
  $region3: #{cnn_block_forward.1} parent=0 // pred_check_branch
    %14 = sbr.rel (0) target = $region5
  $region4: #{cnn_block_forward.1} parent=0 // pred_region
    _
  $region5: #{cnn_block_forward.1} parent=0 // pred_fallthru
    _
  // Predicated region
  $region6: #{cnn_block_forward.1} parent=0 // pred_check
    _
  $region7: #{cnn_block_forward.1} parent=0 // pred_check_branch
    %16 = sbr.rel (0) target = $region9
  $region8: #{cnn_block_forward.1} parent=0 // pred_region
    _
  $region9: #{cnn_block_forward.1} parent=0 // pred_fallthru
    _
  // Predicated region
  $region10: #{cnn_block_forward.1} parent=0 // pred_check
    _
  $region11: #{cnn_block_forward.1} parent=0 // pred_check_branch
    %18 = sbr.rel (0) target = $region13
  $region12: #{cnn_block_forward.1} parent=0 // pred_region
    _
  $region13: #{cnn_block_forward.1} parent=0 // pred_fallthru
    _
  // Predicated region
  $region14: #{cnn_block_forward.1} parent=0 // pred_check
    _
  $region15: #{cnn_block_forward.1} parent=0 // pred_check_branch
    %20 = sbr.rel (0) target = $region17
  $region16: #{cnn_block_forward.1} parent=0 // pred_region
    _
  $region17: #{cnn_block_forward.1} parent=0 // pred_fallthru
    _
  // Predicated region
  $region18: #{cnn_block_forward.1} parent=0 // pred_check
    _
  $region19: #{cnn_block_forward.1} parent=0 // pred_check_branch
    %22 = sbr.rel (0) target = $region21
  $region20: #{cnn_block_forward.1} parent=0 // pred_region
    _
  $region21: #{cnn_block_forward.1} parent=0 // pred_fallthru
    _
  // Predicated region
  $region22: #{cnn_block_forward.1} parent=0 // pred_check
    _
  $region23: #{cnn_block_forward.1} parent=0 // pred_check_branch
    %24 = sbr.rel (0) target = $region25
  $region24: #{cnn_block_forward.1} parent=0 // pred_region
    _
  $region25: #{cnn_block_forward.1} parent=0 // pred_fallthru
    _
  // Predicated region
  $region26: #{cnn_block_forward.1} parent=0 // pred_check
    _
  $region27: #{cnn_block_forward.1} parent=0 // pred_check_branch
    %26 = sbr.rel (0) target = $region29
  $region28: #{cnn_block_forward.1} parent=0 // pred_region
    _
  $region29: #{cnn_block_forward.1} parent=0 // pred_fallthru
    _
  // Predicated region
  $region30: #{cnn_block_forward.1} parent=0 // pred_check
    _
  $region31: #{cnn_block_forward.1} parent=0 // pred_check_branch
    %28 = sbr.rel (0) target = $region33
  $region32: #{cnn_block_forward.1} parent=0 // pred_region
    _
  $region33: #{cnn_block_forward.1} parent=0 // pred_fallthru
    _
  %v30 = vld [vmem:[%s3] sm:$0xff]
  %v31 = vld [vmem:[%s3 + $0x8] sm:$0xff]
  %v32 = vld [vmem:[%s3 + $0x10] sm:$0xff]
  %v33 = vld [vmem:[%s3 + $0x18] sm:$0xff]
  %v34 = vld [vmem:[%s3 + $0x20] sm:$0xff]
  %v35 = vld [vmem:[%s3 + $0x28] sm:$0xff]
  %v36 = vld [vmem:[%s3 + $0x30] sm:$0xff]
  %v37 = vld [vmem:[%s3 + $0x38] sm:$0xff]
  %v38 = vld [vmem:[%s3 + $0x40] sm:$0xff]
  %v39 = vld [vmem:[%s3 + $0x48] sm:$0xff]
  %v40 = vld [vmem:[%s3 + $0x50] sm:$0xff]
  %v41 = vld [vmem:[%s3 + $0x58] sm:$0xff]
  %v42 = vld [vmem:[%s3 + $0x60] sm:$0xff]
  %v43 = vld [vmem:[%s3 + $0x68] sm:$0xff]
  %v44 = vld [vmem:[%s3 + $0x70] sm:$0xff]
  %v45 = vld [vmem:[%s3 + $0x78] sm:$0xff]
  %46 = vst [vmem:[#allocation2] sm:$0x1] 0.0
  %47 = vst [vmem:[#allocation2 + $0x18] sm:$0x1] 0.0
  %48 = vst [vmem:[#allocation2 + $0x11] sm:$0x1] 0.0
  %49 = vst [vmem:[#allocation2 + $0x29] sm:$0x1] 0.0
  %50 = vst [vmem:[#allocation3] sm:$0x1] 0.0
  %51 = vst [vmem:[#allocation3 + $0x18] sm:$0x1] 0.0
  %52 = vst [vmem:[#allocation3 + $0x11] sm:$0x1] 0.0
  %53 = vst [vmem:[#allocation3 + $0x29] sm:$0x1] 0.0
  %v54 = vld [vmem:[%s0] sm:$0xff]
  %v55 = vld [vmem:[%s0 + $0x8] sm:$0xff]
  %v56 = vld [vmem:[%s0 + $0x10] sm:$0xff]
  %v57 = vld [vmem:[%s0 + $0x18] sm:$0xff]
  %58 = vst [vmem:[#allocation2 + $0x1] sm:$0xff] %v54
  %59 = vst [vmem:[#allocation2 + $0x9] sm:$0xff] %v55
  %60 = vst [vmem:[#allocation2 + $0x19] sm:$0xff] %v56
  %61 = vst [vmem:[#allocation2 + $0x21] sm:$0xff] %v57
  %v62 = vld [vmem:[%s4] sm:$0x1]
  %v63 = vld [vmem:[%s5] sm:$0x1]
  %v64 = vld [vmem:[#allocation2] sm:$0xff]
  %v65 = vld [vmem:[#allocation2 + $0x8] sm:$0xff]
  %v66 = vld [vmem:[#allocation2 + $0x18] sm:$0xff]
  %v67 = vld [vmem:[#allocation2 + $0x20] sm:$0xff]
  %v68 = vpack.c.bf16 %v65, %v64
  %v69 = vpack.c.bf16 %v67, %v66
  %v70 = vld [vmem:[%s1] sm:$0xf]
  %v71 = vld [vmem:[%s1 + $0x4] sm:$0xf]
  %v72 = vld [vmem:[%s1 + $0x8] sm:$0xf]
  %v73 = vld [vmem:[%s1 + $0xc] sm:$0xf]
  %v74 = vld [vmem:[%s1 + $0x10] sm:$0xf]
  %v75 = vld [vmem:[%s1 + $0x14] sm:$0xf]
  %v76 = vld [vmem:[%s1 + $0x18] sm:$0xf]
  %v77 = vld [vmem:[%s1 + $0x1c] sm:$0xf]
  %v78 = vld [vmem:[%s1 + $0x20] sm:$0xf]
  %v79 = vld [vmem:[%s1 + $0x24] sm:$0xf]
  %v80 = vld [vmem:[%s1 + $0x28] sm:$0xf]
  %v81 = vld [vmem:[%s1 + $0x2c] sm:$0xf]
  %v82 = vld [vmem:[%s1 + $0x30] sm:$0xf]
  %v83 = vld [vmem:[%s1 + $0x34] sm:$0xf]
  %v84 = vld [vmem:[%s1 + $0x38] sm:$0xf]
  %v85 = vld [vmem:[%s1 + $0x3c] sm:$0xf]
  %v86 = vld [vmem:[#allocation2 + $0x1] sm:$0xff]
  %v87 = vld [vmem:[#allocation2 + $0x9] sm:$0xff]
  %v88 = vld [vmem:[#allocation2 + $0x19] sm:$0xff]
  %v89 = vld [vmem:[#allocation2 + $0x21] sm:$0xff]
  %v90 = vpack.c.bf16 %v87, %v86
  %v91 = vpack.c.bf16 %v89, %v88
  %s92 = scalar_lea.vmem %s1, 64
  %v93 = vld [vmem:[%s92] sm:$0xf]
  %v94 = vld [vmem:[%s92 + $0x4] sm:$0xf]
  %v95 = vld [vmem:[%s92 + $0x8] sm:$0xf]
  %v96 = vld [vmem:[%s92 + $0xc] sm:$0xf]
  %v97 = vld [vmem:[%s92 + $0x10] sm:$0xf]
  %v98 = vld [vmem:[%s92 + $0x14] sm:$0xf]
  %v99 = vld [vmem:[%s92 + $0x18] sm:$0xf]
  %v100 = vld [vmem:[%s92 + $0x1c] sm:$0xf]
  %v101 = vld [vmem:[%s92 + $0x20] sm:$0xf]
  %v102 = vld [vmem:[%s92 + $0x24] sm:$0xf]
  %v103 = vld [vmem:[%s92 + $0x28] sm:$0xf]
  %v104 = vld [vmem:[%s92 + $0x2c] sm:$0xf]
  %v105 = vld [vmem:[%s92 + $0x30] sm:$0xf]
  %v106 = vld [vmem:[%s92 + $0x34] sm:$0xf]
  %v107 = vld [vmem:[%s92 + $0x38] sm:$0xf]
  %v108 = vld [vmem:[%s92 + $0x3c] sm:$0xf]
  %v125 = vunpack.c.l.b16 %v93
  %v126 = vunpack.c.l.b16 %v94
  %v127 = vunpack.c.l.b16 %v95
  %v128 = vunpack.c.l.b16 %v96
  %v129 = vunpack.c.l.b16 %v97
  %v130 = vunpack.c.l.b16 %v98
  %v131 = vunpack.c.l.b16 %v99
  %v132 = vunpack.c.l.b16 %v100
  %v133 = vunpack.c.l.b16 %v101
  %v134 = vunpack.c.l.b16 %v102
  %v135 = vunpack.c.l.b16 %v103
  %v136 = vunpack.c.l.b16 %v104
  %v137 = vunpack.c.l.b16 %v105
  %v138 = vunpack.c.l.b16 %v106
  %v139 = vunpack.c.l.b16 %v107
  %v140 = vunpack.c.l.b16 %v108
  %v141 = vpack.c.b16 %v126, %v125
  %v142 = vpack.c.b16 %v128, %v127
  %v143 = vpack.c.b16 %v130, %v129
  %v144 = vpack.c.b16 %v132, %v131
  %v145 = vpack.c.b16 %v134, %v133
  %v146 = vpack.c.b16 %v136, %v135
  %v147 = vpack.c.b16 %v138, %v137
  %v148 = vpack.c.b16 %v140, %v139
  %157 = vmatprep.subr.bf16.mxu0 0
  %158 = vmatpush1.bf16.msra.mxu0 %v141
  %159 = vmatprep.subr.bf16.mxu0 0
  %160 = vmatpush1.bf16.msra.mxu0 %v142
  %161 = vmatprep.subr.bf16.mxu0 0
  %162 = vmatpush1.bf16.msra.mxu0 %v143
  %163 = vmatprep.subr.bf16.mxu0 0
  %164 = vmatpush1.bf16.msra.mxu0 %v144
  %165 = vmatprep.subr.bf16.mxu0 0
  %166 = vmatpush1.bf16.msra.mxu0 %v145
  %167 = vmatprep.subr.bf16.mxu0 0
  %168 = vmatpush1.bf16.msra.mxu0 %v146
  %169 = vmatprep.subr.bf16.mxu0 0
  %170 = vmatpush1.bf16.msra.mxu0 %v147
  %171 = vmatprep.subr.bf16.mxu0 0
  %172 = vmatpush1.bf16.msra.mxu0 %v148
  %173 = vmatprep.subr.bf16.mxu0 0
  %174 = vmatpush1.bf16.msra.mxu0 0
  %175 = vmatprep.subr.bf16.mxu0 0
  %176 = vmatpush1.bf16.msra.mxu0 0
  %177 = vmatprep.subr.bf16.mxu0 0
  %178 = vmatpush1.bf16.msra.mxu0 0
  %179 = vmatprep.subr.bf16.mxu0 0
  %180 = vmatpush1.bf16.msra.mxu0 0
  %181 = vmatprep.subr.bf16.mxu0 0
  %182 = vmatpush1.bf16.msra.mxu0 0
  %183 = vmatprep.subr.bf16.mxu0 0
  %184 = vmatpush1.bf16.msra.mxu0 0
  %185 = vmatprep.subr.bf16.mxu0 0
  %186 = vmatpush1.bf16.msra.mxu0 0
  %187 = vmatprep.subr.bf16.mxu0 0
  %188 = vmatpush1.bf16.msra.mxu0 0
  %189 = vmatprep.mubr.bf16.mxu0 0
  %190 = vmatmul.mubr.bf16.gmra.mrb[0].mxu0 %v90
  %v191 = vpop.f32.mrb[0].mxu0
  %v192 = vadd.f32 0.0, %v191
  %v193 = vpop.f32.mrb[0].mxu0
  %v194 = vpop.f32.mrb[0].mxu0
  %v195 = vadd.f32 0.0, %v194
  %v196 = vpop.f32.mrb[0].mxu0
  %197 = vmatprep.mubr.bf16.mxu0 0
  %198 = vmatmul.mubr.bf16.gmra.mrb[0].mxu0 %v91
  %v199 = vpop.f32.mrb[0].mxu0
  %v200 = vadd.f32 0.0, %v199
  %v201 = vpop.f32.mrb[0].mxu0
  %v202 = vpop.f32.mrb[0].mxu0
  %v203 = vadd.f32 0.0, %v202
  %v204 = vpop.f32.mrb[0].mxu0
  %205 = vdwg.mxu0
  %v222 = vunpack.c.l.b16 %v70
  %v223 = vunpack.c.l.b16 %v71
  %v224 = vunpack.c.l.b16 %v72
  %v225 = vunpack.c.l.b16 %v73
  %v226 = vunpack.c.l.b16 %v74
  %v227 = vunpack.c.l.b16 %v75
  %v228 = vunpack.c.l.b16 %v76
  %v229 = vunpack.c.l.b16 %v77
  %v230 = vunpack.c.l.b16 %v78
  %v231 = vunpack.c.l.b16 %v79
  %v232 = vunpack.c.l.b16 %v80
  %v233 = vunpack.c.l.b16 %v81
  %v234 = vunpack.c.l.b16 %v82
  %v235 = vunpack.c.l.b16 %v83
  %v236 = vunpack.c.l.b16 %v84
  %v237 = vunpack.c.l.b16 %v85
  %v238 = vpack.c.b16 %v223, %v222
  %v239 = vpack.c.b16 %v225, %v224
  %v240 = vpack.c.b16 %v227, %v226
  %v241 = vpack.c.b16 %v229, %v228
  %v242 = vpack.c.b16 %v231, %v230
  %v243 = vpack.c.b16 %v233, %v232
  %v244 = vpack.c.b16 %v235, %v234
  %v245 = vpack.c.b16 %v237, %v236
  %254 = vmatprep.subr.bf16.mxu0 0
  %255 = vmatpush1.bf16.msra.mxu0 %v238
  %256 = vmatprep.subr.bf16.mxu0 0
  %257 = vmatpush1.bf16.msra.mxu0 %v239
  %258 = vmatprep.subr.bf16.mxu0 0
  %259 = vmatpush1.bf16.msra.mxu0 %v240
  %260 = vmatprep.subr.bf16.mxu0 0
  %261 = vmatpush1.bf16.msra.mxu0 %v241
  %262 = vmatprep.subr.bf16.mxu0 0
  %263 = vmatpush1.bf16.msra.mxu0 %v242
  %264 = vmatprep.subr.bf16.mxu0 0
  %265 = vmatpush1.bf16.msra.mxu0 %v243
  %266 = vmatprep.subr.bf16.mxu0 0
  %267 = vmatpush1.bf16.msra.mxu0 %v244
  %268 = vmatprep.subr.bf16.mxu0 0
  %269 = vmatpush1.bf16.msra.mxu0 %v245
  %270 = vmatprep.subr.bf16.mxu0 0
  %271 = vmatpush1.bf16.msra.mxu0 0
  %272 = vmatprep.subr.bf16.mxu0 0
  %273 = vmatpush1.bf16.msra.mxu0 0
  %274 = vmatprep.subr.bf16.mxu0 0
  %275 = vmatpush1.bf16.msra.mxu0 0
  %276 = vmatprep.subr.bf16.mxu0 0
  %277 = vmatpush1.bf16.msra.mxu0 0
  %278 = vmatprep.subr.bf16.mxu0 0
  %279 = vmatpush1.bf16.msra.mxu0 0
  %280 = vmatprep.subr.bf16.mxu0 0
  %281 = vmatpush1.bf16.msra.mxu0 0
  %282 = vmatprep.subr.bf16.mxu0 0
  %283 = vmatpush1.bf16.msra.mxu0 0
  %284 = vmatprep.subr.bf16.mxu0 0
  %285 = vmatpush1.bf16.msra.mxu0 0
  %286 = vmatprep.mubr.bf16.mxu0 0
  %287 = vmatmul.mubr.bf16.gmra.mrb[0].mxu0 %v68
  %v288 = vpop.f32.mrb[0].mxu0
  %v289 = vadd.f32 %v192, %v288
  %v290 = vpop.f32.mrb[0].mxu0
  %v291 = vpop.f32.mrb[0].mxu0
  %v292 = vadd.f32 %v195, %v291
  %v293 = vpop.f32.mrb[0].mxu0
  %294 = vmatprep.mubr.bf16.mxu0 0
  %295 = vmatmul.mubr.bf16.gmra.mrb[0].mxu0 %v69
  %v296 = vpop.f32.mrb[0].mxu0
  %v297 = vadd.f32 %v200, %v296
  %v298 = vpop.f32.mrb[0].mxu0
  %v299 = vpop.f32.mrb[0].mxu0
  %v300 = vadd.f32 %v203, %v299
  %v301 = vpop.f32.mrb[0].mxu0
  %302 = vdwg.mxu0
  %v303 = vld [vmem:[#allocation2 + $0x2] sm:$0xff]
  %v304 = vld [vmem:[#allocation2 + $0xa] sm:$0xff]
  %v305 = vld [vmem:[#allocation2 + $0x1a] sm:$0xff]
  %v306 = vld [vmem:[#allocation2 + $0x22] sm:$0xff]
  %v307 = vpack.c.bf16 %v304, %v303
  %v308 = vpack.c.bf16 %v306, %v305
  %s309 = scalar_lea.vmem %s1, 128
  %v310 = vld [vmem:[%s309] sm:$0xf]
  %v311 = vld [vmem:[%s309 + $0x4] sm:$0xf]
  %v312 = vld [vmem:[%s309 + $0x8] sm:$0xf]
  %v313 = vld [vmem:[%s309 + $0xc] sm:$0xf]
  %v314 = vld [vmem:[%s309 + $0x10] sm:$0xf]
  %v315 = vld [vmem:[%s309 + $0x14] sm:$0xf]
  %v316 = vld [vmem:[%s309 + $0x18] sm:$0xf]
  %v317 = vld [vmem:[%s309 + $0x1c] sm:$0xf]
  %v318 = vld [vmem:[%s309 + $0x20] sm:$0xf]
  %v319 = vld [vmem:[%s309 + $0x24] sm:$0xf]
  %v320 = vld [vmem:[%s309 + $0x28] sm:$0xf]
  %v321 = vld [vmem:[%s309 + $0x2c] sm:$0xf]
  %v322 = vld [vmem:[%s309 + $0x30] sm:$0xf]
  %v323 = vld [vmem:[%s309 + $0x34] sm:$0xf]
  %v324 = vld [vmem:[%s309 + $0x38] sm:$0xf]
  %v325 = vld [vmem:[%s309 + $0x3c] sm:$0xf]
  %v342 = vunpack.c.l.b16 %v310
  %v343 = vunpack.c.l.b16 %v311
  %v344 = vunpack.c.l.b16 %v312
  %v345 = vunpack.c.l.b16 %v313
  %v346 = vunpack.c.l.b16 %v314
  %v347 = vunpack.c.l.b16 %v315
  %v348 = vunpack.c.l.b16 %v316
  %v349 = vunpack.c.l.b16 %v317
  %v350 = vunpack.c.l.b16 %v318
  %v351 = vunpack.c.l.b16 %v319
  %v352 = vunpack.c.l.b16 %v320
  %v353 = vunpack.c.l.b16 %v321
  %v354 = vunpack.c.l.b16 %v322
  %v355 = vunpack.c.l.b16 %v323
  %v356 = vunpack.c.l.b16 %v324
  %v357 = vunpack.c.l.b16 %v325
  %v358 = vpack.c.b16 %v343, %v342
  %v359 = vpack.c.b16 %v345, %v344
  %v360 = vpack.c.b16 %v347, %v346
  %v361 = vpack.c.b16 %v349, %v348
  %v362 = vpack.c.b16 %v351, %v350
  %v363 = vpack.c.b16 %v353, %v352
  %v364 = vpack.c.b16 %v355, %v354
  %v365 = vpack.c.b16 %v357, %v356
  %374 = vmatprep.subr.bf16.mxu0 0
  %375 = vmatpush1.bf16.msra.mxu0 %v358
  %376 = vmatprep.subr.bf16.mxu0 0
  %377 = vmatpush1.bf16.msra.mxu0 %v359
  %378 = vmatprep.subr.bf16.mxu0 0
  %379 = vmatpush1.bf16.msra.mxu0 %v360
  %380 = vmatprep.subr.bf16.mxu0 0
  %381 = vmatpush1.bf16.msra.mxu0 %v361
  %382 = vmatprep.subr.bf16.mxu0 0
  %383 = vmatpush1.bf16.msra.mxu0 %v362
  %384 = vmatprep.subr.bf16.mxu0 0
  %385 = vmatpush1.bf16.msra.mxu0 %v363
  %386 = vmatprep.subr.bf16.mxu0 0
  %387 = vmatpush1.bf16.msra.mxu0 %v364
  %388 = vmatprep.subr.bf16.mxu0 0
  %389 = vmatpush1.bf16.msra.mxu0 %v365
  %390 = vmatprep.subr.bf16.mxu0 0
  %391 = vmatpush1.bf16.msra.mxu0 0
  %392 = vmatprep.subr.bf16.mxu0 0
  %393 = vmatpush1.bf16.msra.mxu0 0
  %394 = vmatprep.subr.bf16.mxu0 0
  %395 = vmatpush1.bf16.msra.mxu0 0
  %396 = vmatprep.subr.bf16.mxu0 0
  %397 = vmatpush1.bf16.msra.mxu0 0
  %398 = vmatprep.subr.bf16.mxu0 0
  %399 = vmatpush1.bf16.msra.mxu0 0
  %400 = vmatprep.subr.bf16.mxu0 0
  %401 = vmatpush1.bf16.msra.mxu0 0
  %402 = vmatprep.subr.bf16.mxu0 0
  %403 = vmatpush1.bf16.msra.mxu0 0
  %404 = vmatprep.subr.bf16.mxu0 0
  %405 = vmatpush1.bf16.msra.mxu0 0
  %406 = vmatprep.mubr.bf16.mxu0 0
  %407 = vmatmul.mubr.bf16.gmra.mrb[0].mxu0 %v307
  %v408 = vpop.f32.mrb[0].mxu0
  %v409 = vadd.f32 0.0, %v408
  %v410 = vpop.f32.mrb[0].mxu0
  %v411 = vpop.f32.mrb[0].mxu0
  %v412 = vadd.f32 0.0, %v411
  %v413 = vpop.f32.mrb[0].mxu0
  %414 = vmatprep.mubr.bf16.mxu0 0
  %415 = vmatmul.mubr.bf16.gmra.mrb[0].mxu0 %v308
  %v416 = vpop.f32.mrb[0].mxu0
  %v417 = vadd.f32 0.0, %v416
  %v418 = vpop.f32.mrb[0].mxu0
  %v419 = vpop.f32.mrb[0].mxu0
  %v420 = vadd.f32 0.0, %v419
  %v421 = vpop.f32.mrb[0].mxu0
  %422 = vdwg.mxu0
  %v423 = vadd.f32 %v289, %v409
  %v424 = vadd.f32 %v292, %v412
  %v425 = vadd.f32 %v297, %v417
  %v426 = vadd.f32 %v300, %v420
  %v427 = vadd.f32 %v423, %v424
  %v428 = vadd.f32 %v427, %v425
  %v429 = vadd.f32 %v428, %v426
  %v430 = vrot.slane %v429, 4
  %v431 = vadd.f32 %v429, %v430
  %v432 = vrot.slane %v431, 2
  %v433 = vadd.f32 %v431, %v432
  %v434 = vrot.slane %v433, 1
  %v435 = vadd.f32 %v433, %v434
  %436 = vmatprep.subr.mxu0 0.0
  %437 = vmatpush1.msra.mxu0 %v30
  %438 = vmatprep.subr.mxu0 0.0
  %439 = vmatpush1.msra.mxu0 %v31
  %440 = vmatprep.subr.mxu0 0.0
  %441 = vmatpush1.msra.mxu0 %v32
  %442 = vmatprep.subr.mxu0 0.0
  %443 = vmatpush1.msra.mxu0 %v33
  %444 = vmatprep.subr.mxu0 0.0
  %445 = vmatpush1.msra.mxu0 %v34
  %446 = vmatprep.subr.mxu0 0.0
  %447 = vmatpush1.msra.mxu0 %v35
  %448 = vmatprep.subr.mxu0 0.0
  %449 = vmatpush1.msra.mxu0 %v36
  %450 = vmatprep.subr.mxu0 0.0
  %451 = vmatpush1.msra.mxu0 %v37
  %452 = vmatprep.subr.mxu0 0.0
  %453 = vmatpush1.msra.mxu0 %v38
  %454 = vmatprep.subr.mxu0 0.0
  %455 = vmatpush1.msra.mxu0 %v39
  %456 = vmatprep.subr.mxu0 0.0
  %457 = vmatpush1.msra.mxu0 %v40
  %458 = vmatprep.subr.mxu0 0.0
  %459 = vmatpush1.msra.mxu0 %v41
  %460 = vmatprep.subr.mxu0 0.0
  %461 = vmatpush1.msra.mxu0 %v42
  %462 = vmatprep.subr.mxu0 0.0
  %463 = vmatpush1.msra.mxu0 %v43
  %464 = vmatprep.subr.mxu0 0.0
  %465 = vmatpush1.msra.mxu0 %v44
  %466 = vmatprep.subr.mxu0 0.0
  %467 = vmatpush1.msra.mxu0 %v45
  %468 = vmatprep.subr.mxu0 0.0
  %469 = vmatpush1.msra.mxu0 0.0
  %470 = vmatprep.subr.mxu0 0.0
  %471 = vmatpush1.msra.mxu0 0.0
  %472 = vmatprep.subr.mxu0 0.0
  %473 = vmatpush1.msra.mxu0 0.0
  %474 = vmatprep.subr.mxu0 0.0
  %475 = vmatpush1.msra.mxu0 0.0
  %476 = vmatprep.subr.mxu0 0.0
  %477 = vmatpush1.msra.mxu0 0.0
  %478 = vmatprep.subr.mxu0 0.0
  %479 = vmatpush1.msra.mxu0 0.0
  %480 = vmatprep.subr.mxu0 0.0
  %481 = vmatpush1.msra.mxu0 0.0
  %482 = vmatprep.subr.mxu0 0.0
  %483 = vmatpush1.msra.mxu0 0.0
  %484 = vmatprep.subr.mxu0 0.0
  %485 = vmatpush1.msra.mxu0 0.0
  %486 = vmatprep.subr.mxu0 0.0
  %487 = vmatpush1.msra.mxu0 0.0
  %488 = vmatprep.subr.mxu0 0.0
  %489 = vmatpush1.msra.mxu0 0.0
  %490 = vmatprep.subr.mxu0 0.0
  %491 = vmatpush1.msra.mxu0 0.0
  %492 = vmatprep.subr.mxu0 0.0
  %493 = vmatpush1.msra.mxu0 0.0
  %494 = vmatprep.subr.mxu0 0.0
  %495 = vmatpush1.msra.mxu0 0.0
  %496 = vmatprep.subr.mxu0 0.0
  %497 = vmatpush1.msra.mxu0 0.0
  %498 = vmatprep.subr.mxu0 0.0
  %499 = vmatpush1.msra.mxu0 0.0
  %500 = vmatprep.mubr.f32.mxu0 0.0
  %501 = vmatmul.mubr.f32.gmra.mrb[0].mxu0 %v435
  %v502 = vpop.f32.mrb[0].mxu0
  %v503 = vadd.f32 0.0, %v502
  %v504 = vpop.f32.mrb[0].mxu0
  %505 = vdwg.mxu0
  %v506 = vmul.f32 %v503, 0.001953125
  %v507 = vlaneseq
  %v508 = vshrl.u32 %v507, 7
  %v509 = vsub.s32 0, %v508
  %v510 = vrot.slane %v506, %v509
  %v511 = vsub.f32 %v423, %v510
  %v512 = vsub.f32 %v424, %v510
  %v513 = vsub.f32 %v425, %v510
  %v514 = vsub.f32 %v426, %v510
  %v515 = vmul.f32 %v511, %v511
  %v516 = vmul.f32 %v512, %v512
  %v517 = vmul.f32 %v513, %v513
  %v518 = vmul.f32 %v514, %v514
  %v519 = vadd.f32 %v515, %v516
  %v520 = vadd.f32 %v519, %v517
  %v521 = vadd.f32 %v520, %v518
  %v522 = vrot.slane %v521, 4
  %v523 = vadd.f32 %v521, %v522
  %v524 = vrot.slane %v523, 2
  %v525 = vadd.f32 %v523, %v524
  %v526 = vrot.slane %v525, 1
  %v527 = vadd.f32 %v525, %v526
  %528 = vmatprep.subr.mxu0 0.0
  %529 = vmatpush1.msra.mxu0 %v30
  %530 = vmatprep.subr.mxu0 0.0
  %531 = vmatpush1.msra.mxu0 %v31
  %532 = vmatprep.subr.mxu0 0.0
  %533 = vmatpush1.msra.mxu0 %v32
  %534 = vmatprep.subr.mxu0 0.0
  %535 = vmatpush1.msra.mxu0 %v33
  %536 = vmatprep.subr.mxu0 0.0
  %537 = vmatpush1.msra.mxu0 %v34
  %538 = vmatprep.subr.mxu0 0.0
  %539 = vmatpush1.msra.mxu0 %v35
  %540 = vmatprep.subr.mxu0 0.0
  %541 = vmatpush1.msra.mxu0 %v36
  %542 = vmatprep.subr.mxu0 0.0
  %543 = vmatpush1.msra.mxu0 %v37
  %544 = vmatprep.subr.mxu0 0.0
  %545 = vmatpush1.msra.mxu0 %v38
  %546 = vmatprep.subr.mxu0 0.0
  %547 = vmatpush1.msra.mxu0 %v39
  %548 = vmatprep.subr.mxu0 0.0
  %549 = vmatpush1.msra.mxu0 %v40
  %550 = vmatprep.subr.mxu0 0.0
  %551 = vmatpush1.msra.mxu0 %v41
  %552 = vmatprep.subr.mxu0 0.0
  %553 = vmatpush1.msra.mxu0 %v42
  %554 = vmatprep.subr.mxu0 0.0
  %555 = vmatpush1.msra.mxu0 %v43
  %556 = vmatprep.subr.mxu0 0.0
  %557 = vmatpush1.msra.mxu0 %v44
  %558 = vmatprep.subr.mxu0 0.0
  %559 = vmatpush1.msra.mxu0 %v45
  %560 = vmatprep.subr.mxu0 0.0
  %561 = vmatpush1.msra.mxu0 0.0
  %562 = vmatprep.subr.mxu0 0.0
  %563 = vmatpush1.msra.mxu0 0.0
  %564 = vmatprep.subr.mxu0 0.0
  %565 = vmatpush1.msra.mxu0 0.0
  %566 = vmatprep.subr.mxu0 0.0
  %567 = vmatpush1.msra.mxu0 0.0
  %568 = vmatprep.subr.mxu0 0.0
  %569 = vmatpush1.msra.mxu0 0.0
  %570 = vmatprep.subr.mxu0 0.0
  %571 = vmatpush1.msra.mxu0 0.0
  %572 = vmatprep.subr.mxu0 0.0
  %573 = vmatpush1.msra.mxu0 0.0
  %574 = vmatprep.subr.mxu0 0.0
  %575 = vmatpush1.msra.mxu0 0.0
  %576 = vmatprep.subr.mxu0 0.0
  %577 = vmatpush1.msra.mxu0 0.0
  %578 = vmatprep.subr.mxu0 0.0
  %579 = vmatpush1.msra.mxu0 0.0
  %580 = vmatprep.subr.mxu0 0.0
  %581 = vmatpush1.msra.mxu0 0.0
  %582 = vmatprep.subr.mxu0 0.0
  %583 = vmatpush1.msra.mxu0 0.0
  %584 = vmatprep.subr.mxu0 0.0
  %585 = vmatpush1.msra.mxu0 0.0
  %586 = vmatprep.subr.mxu0 0.0
  %587 = vmatpush1.msra.mxu0 0.0
  %588 = vmatprep.subr.mxu0 0.0
  %589 = vmatpush1.msra.mxu0 0.0
  %590 = vmatprep.subr.mxu0 0.0
  %591 = vmatpush1.msra.mxu0 0.0
  %592 = vmatprep.mubr.f32.mxu0 0.0
  %593 = vmatmul.mubr.f32.gmra.mrb[0].mxu0 %v527
  %v594 = vpop.f32.mrb[0].mxu0
  %v595 = vadd.f32 0.0, %v594
  %v596 = vpop.f32.mrb[0].mxu0
  %597 = vdwg.mxu0
  %v598 = vmul.f32 %v595, 0.001953125
  %v599 = vadd.f32 %v598, 1e-05
  %v600 = vrsqrt.pop %v599
  %v601 = vmul.f32 %v62, %v600
  %v603 = vlaneseq
  %v604 = vshrl.u32 %v603, 7
  %v605 = vsub.s32 0, %v604
  %v606 = vrot.slane %v601, %v605
  %v608 = vmul.f32 %v511, %v606
  %v609 = vmul.f32 %v512, %v606
  %v610 = vmul.f32 %v513, %v606
  %v611 = vmul.f32 %v514, %v606
  %v613 = vlaneseq
  %v614 = vshrl.u32 %v613, 7
  %v615 = vsub.s32 0, %v614
  %v616 = vrot.slane %v63, %v615
  %v618 = vadd.f32 %v608, %v616
  %v619 = vadd.f32 %v609, %v616
  %v620 = vadd.f32 %v610, %v616
  %v621 = vadd.f32 %v611, %v616
  %v622 = vmax.f32 %v618, 0.0
  %v623 = vmax.f32 %v619, 0.0
  %v624 = vmax.f32 %v620, 0.0
  %v625 = vmax.f32 %v621, 0.0
  %626 = vst [vmem:[#allocation3 + $0x1] sm:$0xff] %v622
  %627 = vst [vmem:[#allocation3 + $0x9] sm:$0xff] %v623
  %628 = vst [vmem:[#allocation3 + $0x19] sm:$0xff] %v624
  %629 = vst [vmem:[#allocation3 + $0x21] sm:$0xff] %v625
  %v630 = vld [vmem:[%s6] sm:$0x1]
  %v631 = vld [vmem:[%s7] sm:$0x1]
  %v632 = vld [vmem:[#allocation3] sm:$0xff]
  %v633 = vld [vmem:[#allocation3 + $0x8] sm:$0xff]
  %v634 = vld [vmem:[#allocation3 + $0x18] sm:$0xff]
  %v635 = vld [vmem:[#allocation3 + $0x20] sm:$0xff]
  %v636 = vpack.c.bf16 %v633, %v632
  %v637 = vpack.c.bf16 %v635, %v634
  %v638 = vld [vmem:[%s2] sm:$0xf]
  %v639 = vld [vmem:[%s2 + $0x4] sm:$0xf]
  %v640 = vld [vmem:[%s2 + $0x8] sm:$0xf]
  %v641 = vld [vmem:[%s2 + $0xc] sm:$0xf]
  %v642 = vld [vmem:[%s2 + $0x10] sm:$0xf]
  %v643 = vld [vmem:[%s2 + $0x14] sm:$0xf]
  %v644 = vld [vmem:[%s2 + $0x18] sm:$0xf]
  %v645 = vld [vmem:[%s2 + $0x1c] sm:$0xf]
  %v646 = vld [vmem:[%s2 + $0x20] sm:$0xf]
  %v647 = vld [vmem:[%s2 + $0x24] sm:$0xf]
  %v648 = vld [vmem:[%s2 + $0x28] sm:$0xf]
  %v649 = vld [vmem:[%s2 + $0x2c] sm:$0xf]
  %v650 = vld [vmem:[%s2 + $0x30] sm:$0xf]
  %v651 = vld [vmem:[%s2 + $0x34] sm:$0xf]
  %v652 = vld [vmem:[%s2 + $0x38] sm:$0xf]
  %v653 = vld [vmem:[%s2 + $0x3c] sm:$0xf]
  %v654 = vld [vmem:[#allocation3 + $0x1] sm:$0xff]
  %v655 = vld [vmem:[#allocation3 + $0x9] sm:$0xff]
  %v656 = vld [vmem:[#allocation3 + $0x19] sm:$0xff]
  %v657 = vld [vmem:[#allocation3 + $0x21] sm:$0xff]
  %v658 = vpack.c.bf16 %v655, %v654
  %v659 = vpack.c.bf16 %v657, %v656
  %s660 = scalar_lea.vmem %s2, 64
  %v661 = vld [vmem:[%s660] sm:$0xf]
  %v662 = vld [vmem:[%s660 + $0x4] sm:$0xf]
  %v663 = vld [vmem:[%s660 + $0x8] sm:$0xf]
  %v664 = vld [vmem:[%s660 + $0xc] sm:$0xf]
  %v665 = vld [vmem:[%s660 + $0x10] sm:$0xf]
  %v666 = vld [vmem:[%s660 + $0x14] sm:$0xf]
  %v667 = vld [vmem:[%s660 + $0x18] sm:$0xf]
  %v668 = vld [vmem:[%s660 + $0x1c] sm:$0xf]
  %v669 = vld [vmem:[%s660 + $0x20] sm:$0xf]
  %v670 = vld [vmem:[%s660 + $0x24] sm:$0xf]
  %v671 = vld [vmem:[%s660 + $0x28] sm:$0xf]
  %v672 = vld [vmem:[%s660 + $0x2c] sm:$0xf]
  %v673 = vld [vmem:[%s660 + $0x30] sm:$0xf]
  %v674 = vld [vmem:[%s660 + $0x34] sm:$0xf]
  %v675 = vld [vmem:[%s660 + $0x38] sm:$0xf]
  %v676 = vld [vmem:[%s660 + $0x3c] sm:$0xf]
  %v693 = vunpack.c.l.b16 %v661
  %v694 = vunpack.c.l.b16 %v662
  %v695 = vunpack.c.l.b16 %v663
  %v696 = vunpack.c.l.b16 %v664
  %v697 = vunpack.c.l.b16 %v665
  %v698 = vunpack.c.l.b16 %v666
  %v699 = vunpack.c.l.b16 %v667
  %v700 = vunpack.c.l.b16 %v668
  %v701 = vunpack.c.l.b16 %v669
  %v702 = vunpack.c.l.b16 %v670
  %v703 = vunpack.c.l.b16 %v671
  %v704 = vunpack.c.l.b16 %v672
  %v705 = vunpack.c.l.b16 %v673
  %v706 = vunpack.c.l.b16 %v674
  %v707 = vunpack.c.l.b16 %v675
  %v708 = vunpack.c.l.b16 %v676
  %v709 = vpack.c.b16 %v694, %v693
  %v710 = vpack.c.b16 %v696, %v695
  %v711 = vpack.c.b16 %v698, %v697
  %v712 = vpack.c.b16 %v700, %v699
  %v713 = vpack.c.b16 %v702, %v701
  %v714 = vpack.c.b16 %v704, %v703
  %v715 = vpack.c.b16 %v706, %v705
  %v716 = vpack.c.b16 %v708, %v707
  %725 = vmatprep.subr.bf16.mxu0 0
  %726 = vmatpush1.bf16.msra.mxu0 %v709
  %727 = vmatprep.subr.bf16.mxu0 0
  %728 = vmatpush1.bf16.msra.mxu0 %v710
  %729 = vmatprep.subr.bf16.mxu0 0
  %730 = vmatpush1.bf16.msra.mxu0 %v711
  %731 = vmatprep.subr.bf16.mxu0 0
  %732 = vmatpush1.bf16.msra.mxu0 %v712
  %733 = vmatprep.subr.bf16.mxu0 0
  %734 = vmatpush1.bf16.msra.mxu0 %v713
  %735 = vmatprep.subr.bf16.mxu0 0
  %736 = vmatpush1.bf16.msra.mxu0 %v714
  %737 = vmatprep.subr.bf16.mxu0 0
  %738 = vmatpush1.bf16.msra.mxu0 %v715
  %739 = vmatprep.subr.bf16.mxu0 0
  %740 = vmatpush1.bf16.msra.mxu0 %v716
  %741 = vmatprep.subr.bf16.mxu0 0
  %742 = vmatpush1.bf16.msra.mxu0 0
  %743 = vmatprep.subr.bf16.mxu0 0
  %744 = vmatpush1.bf16.msra.mxu0 0
  %745 = vmatprep.subr.bf16.mxu0 0
  %746 = vmatpush1.bf16.msra.mxu0 0
  %747 = vmatprep.subr.bf16.mxu0 0
  %748 = vmatpush1.bf16.msra.mxu0 0
  %749 = vmatprep.subr.bf16.mxu0 0
  %750 = vmatpush1.bf16.msra.mxu0 0
  %751 = vmatprep.subr.bf16.mxu0 0
  %752 = vmatpush1.bf16.msra.mxu0 0
  %753 = vmatprep.subr.bf16.mxu0 0
  %754 = vmatpush1.bf16.msra.mxu0 0
  %755 = vmatprep.subr.bf16.mxu0 0
  %756 = vmatpush1.bf16.msra.mxu0 0
  %757 = vmatprep.mubr.bf16.mxu0 0
  %758 = vmatmul.mubr.bf16.gmra.mrb[0].mxu0 %v658
  %v759 = vpop.f32.mrb[0].mxu0
  %v760 = vadd.f32 0.0, %v759
  %v761 = vpop.f32.mrb[0].mxu0
  %v762 = vpop.f32.mrb[0].mxu0
  %v763 = vadd.f32 0.0, %v762
  %v764 = vpop.f32.mrb[0].mxu0
  %765 = vmatprep.mubr.bf16.mxu0 0
  %766 = vmatmul.mubr.bf16.gmra.mrb[0].mxu0 %v659
  %v767 = vpop.f32.mrb[0].mxu0
  %v768 = vadd.f32 0.0, %v767
  %v769 = vpop.f32.mrb[0].mxu0
  %v770 = vpop.f32.mrb[0].mxu0
  %v771 = vadd.f32 0.0, %v770
  %v772 = vpop.f32.mrb[0].mxu0
  %773 = vdwg.mxu0
  %v790 = vunpack.c.l.b16 %v638
  %v791 = vunpack.c.l.b16 %v639
  %v792 = vunpack.c.l.b16 %v640
  %v793 = vunpack.c.l.b16 %v641
  %v794 = vunpack.c.l.b16 %v642
  %v795 = vunpack.c.l.b16 %v643
  %v796 = vunpack.c.l.b16 %v644
  %v797 = vunpack.c.l.b16 %v645
  %v798 = vunpack.c.l.b16 %v646
  %v799 = vunpack.c.l.b16 %v647
  %v800 = vunpack.c.l.b16 %v648
  %v801 = vunpack.c.l.b16 %v649
  %v802 = vunpack.c.l.b16 %v650
  %v803 = vunpack.c.l.b16 %v651
  %v804 = vunpack.c.l.b16 %v652
  %v805 = vunpack.c.l.b16 %v653
  %v806 = vpack.c.b16 %v791, %v790
  %v807 = vpack.c.b16 %v793, %v792
  %v808 = vpack.c.b16 %v795, %v794
  %v809 = vpack.c.b16 %v797, %v796
  %v810 = vpack.c.b16 %v799, %v798
  %v811 = vpack.c.b16 %v801, %v800
  %v812 = vpack.c.b16 %v803, %v802
  %v813 = vpack.c.b16 %v805, %v804
  %822 = vmatprep.subr.bf16.mxu0 0
  %823 = vmatpush1.bf16.msra.mxu0 %v806
  %824 = vmatprep.subr.bf16.mxu0 0
  %825 = vmatpush1.bf16.msra.mxu0 %v807
  %826 = vmatprep.subr.bf16.mxu0 0
  %827 = vmatpush1.bf16.msra.mxu0 %v808
  %828 = vmatprep.subr.bf16.mxu0 0
  %829 = vmatpush1.bf16.msra.mxu0 %v809
  %830 = vmatprep.subr.bf16.mxu0 0
  %831 = vmatpush1.bf16.msra.mxu0 %v810
  %832 = vmatprep.subr.bf16.mxu0 0
  %833 = vmatpush1.bf16.msra.mxu0 %v811
  %834 = vmatprep.subr.bf16.mxu0 0
  %835 = vmatpush1.bf16.msra.mxu0 %v812
  %836 = vmatprep.subr.bf16.mxu0 0
  %837 = vmatpush1.bf16.msra.mxu0 %v813
  %838 = vmatprep.subr.bf16.mxu0 0
  %839 = vmatpush1.bf16.msra.mxu0 0
  %840 = vmatprep.subr.bf16.mxu0 0
  %841 = vmatpush1.bf16.msra.mxu0 0
  %842 = vmatprep.subr.bf16.mxu0 0
  %843 = vmatpush1.bf16.msra.mxu0 0
  %844 = vmatprep.subr.bf16.mxu0 0
  %845 = vmatpush1.bf16.msra.mxu0 0
  %846 = vmatprep.subr.bf16.mxu0 0
  %847 = vmatpush1.bf16.msra.mxu0 0
  %848 = vmatprep.subr.bf16.mxu0 0
  %849 = vmatpush1.bf16.msra.mxu0 0
  %850 = vmatprep.subr.bf16.mxu0 0
  %851 = vmatpush1.bf16.msra.mxu0 0
  %852 = vmatprep.subr.bf16.mxu0 0
  %853 = vmatpush1.bf16.msra.mxu0 0
  %854 = vmatprep.mubr.bf16.mxu0 0
  %855 = vmatmul.mubr.bf16.gmra.mrb[0].mxu0 %v636
  %v856 = vpop.f32.mrb[0].mxu0
  %v857 = vadd.f32 %v760, %v856
  %v858 = vpop.f32.mrb[0].mxu0
  %v859 = vpop.f32.mrb[0].mxu0
  %v860 = vadd.f32 %v763, %v859
  %v861 = vpop.f32.mrb[0].mxu0
  %862 = vmatprep.mubr.bf16.mxu0 0
  %863 = vmatmul.mubr.bf16.gmra.mrb[0].mxu0 %v637
  %v864 = vpop.f32.mrb[0].mxu0
  %v865 = vadd.f32 %v768, %v864
  %v866 = vpop.f32.mrb[0].mxu0
  %v867 = vpop.f32.mrb[0].mxu0
  %v868 = vadd.f32 %v771, %v867
  %v869 = vpop.f32.mrb[0].mxu0
  %870 = vdwg.mxu0
  %v871 = vld [vmem:[#allocation3 + $0x2] sm:$0xff]
  %v872 = vld [vmem:[#allocation3 + $0xa] sm:$0xff]
  %v873 = vld [vmem:[#allocation3 + $0x1a] sm:$0xff]
  %v874 = vld [vmem:[#allocation3 + $0x22] sm:$0xff]
  %v875 = vpack.c.bf16 %v872, %v871
  %v876 = vpack.c.bf16 %v874, %v873
  %s877 = scalar_lea.vmem %s2, 128
  %v878 = vld [vmem:[%s877] sm:$0xf]
  %v879 = vld [vmem:[%s877 + $0x4] sm:$0xf]
  %v880 = vld [vmem:[%s877 + $0x8] sm:$0xf]
  %v881 = vld [vmem:[%s877 + $0xc] sm:$0xf]
  %v882 = vld [vmem:[%s877 + $0x10] sm:$0xf]
  %v883 = vld [vmem:[%s877 + $0x14] sm:$0xf]
  %v884 = vld [vmem:[%s877 + $0x18] sm:$0xf]
  %v885 = vld [vmem:[%s877 + $0x1c] sm:$0xf]
  %v886 = vld [vmem:[%s877 + $0x20] sm:$0xf]
  %v887 = vld [vmem:[%s877 + $0x24] sm:$0xf]
  %v888 = vld [vmem:[%s877 + $0x28] sm:$0xf]
  %v889 = vld [vmem:[%s877 + $0x2c] sm:$0xf]
  %v890 = vld [vmem:[%s877 + $0x30] sm:$0xf]
  %v891 = vld [vmem:[%s877 + $0x34] sm:$0xf]
  %v892 = vld [vmem:[%s877 + $0x38] sm:$0xf]
  %v893 = vld [vmem:[%s877 + $0x3c] sm:$0xf]
  %v910 = vunpack.c.l.b16 %v878
  %v911 = vunpack.c.l.b16 %v879
  %v912 = vunpack.c.l.b16 %v880
  %v913 = vunpack.c.l.b16 %v881
  %v914 = vunpack.c.l.b16 %v882
  %v915 = vunpack.c.l.b16 %v883
  %v916 = vunpack.c.l.b16 %v884
  %v917 = vunpack.c.l.b16 %v885
  %v918 = vunpack.c.l.b16 %v886
  %v919 = vunpack.c.l.b16 %v887
  %v920 = vunpack.c.l.b16 %v888
  %v921 = vunpack.c.l.b16 %v889
  %v922 = vunpack.c.l.b16 %v890
  %v923 = vunpack.c.l.b16 %v891
  %v924 = vunpack.c.l.b16 %v892
  %v925 = vunpack.c.l.b16 %v893
  %v926 = vpack.c.b16 %v911, %v910
  %v927 = vpack.c.b16 %v913, %v912
  %v928 = vpack.c.b16 %v915, %v914
  %v929 = vpack.c.b16 %v917, %v916
  %v930 = vpack.c.b16 %v919, %v918
  %v931 = vpack.c.b16 %v921, %v920
  %v932 = vpack.c.b16 %v923, %v922
  %v933 = vpack.c.b16 %v925, %v924
  %942 = vmatprep.subr.bf16.mxu0 0
  %943 = vmatpush1.bf16.msra.mxu0 %v926
  %944 = vmatprep.subr.bf16.mxu0 0
  %945 = vmatpush1.bf16.msra.mxu0 %v927
  %946 = vmatprep.subr.bf16.mxu0 0
  %947 = vmatpush1.bf16.msra.mxu0 %v928
  %948 = vmatprep.subr.bf16.mxu0 0
  %949 = vmatpush1.bf16.msra.mxu0 %v929
  %950 = vmatprep.subr.bf16.mxu0 0
  %951 = vmatpush1.bf16.msra.mxu0 %v930
  %952 = vmatprep.subr.bf16.mxu0 0
  %953 = vmatpush1.bf16.msra.mxu0 %v931
  %954 = vmatprep.subr.bf16.mxu0 0
  %955 = vmatpush1.bf16.msra.mxu0 %v932
  %956 = vmatprep.subr.bf16.mxu0 0
  %957 = vmatpush1.bf16.msra.mxu0 %v933
  %958 = vmatprep.subr.bf16.mxu0 0
  %959 = vmatpush1.bf16.msra.mxu0 0
  %960 = vmatprep.subr.bf16.mxu0 0
  %961 = vmatpush1.bf16.msra.mxu0 0
  %962 = vmatprep.subr.bf16.mxu0 0
  %963 = vmatpush1.bf16.msra.mxu0 0
  %964 = vmatprep.subr.bf16.mxu0 0
  %965 = vmatpush1.bf16.msra.mxu0 0
  %966 = vmatprep.subr.bf16.mxu0 0
  %967 = vmatpush1.bf16.msra.mxu0 0
  %968 = vmatprep.subr.bf16.mxu0 0
  %969 = vmatpush1.bf16.msra.mxu0 0
  %970 = vmatprep.subr.bf16.mxu0 0
  %971 = vmatpush1.bf16.msra.mxu0 0
  %972 = vmatprep.subr.bf16.mxu0 0
  %973 = vmatpush1.bf16.msra.mxu0 0
  %974 = vmatprep.mubr.bf16.mxu0 0
  %975 = vmatmul.mubr.bf16.gmra.mrb[0].mxu0 %v875
  %v976 = vpop.f32.mrb[0].mxu0
  %v977 = vadd.f32 0.0, %v976
  %v978 = vpop.f32.mrb[0].mxu0
  %v979 = vpop.f32.mrb[0].mxu0
  %v980 = vadd.f32 0.0, %v979
  %v981 = vpop.f32.mrb[0].mxu0
  %982 = vmatprep.mubr.bf16.mxu0 0
  %983 = vmatmul.mubr.bf16.gmra.mrb[0].mxu0 %v876
  %v984 = vpop.f32.mrb[0].mxu0
  %v985 = vadd.f32 0.0, %v984
  %v986 = vpop.f32.mrb[0].mxu0
  %v987 = vpop.f32.mrb[0].mxu0
  %v988 = vadd.f32 0.0, %v987
  %v989 = vpop.f32.mrb[0].mxu0
  %990 = vdwg.mxu0
  %v991 = vadd.f32 %v857, %v977
  %v992 = vadd.f32 %v860, %v980
  %v993 = vadd.f32 %v865, %v985
  %v994 = vadd.f32 %v868, %v988
  %v995 = vadd.f32 %v991, %v992
  %v996 = vadd.f32 %v995, %v993
  %v997 = vadd.f32 %v996, %v994
  %v998 = vrot.slane %v997, 4
  %v999 = vadd.f32 %v997, %v998
  %v1000 = vrot.slane %v999, 2
  %v1001 = vadd.f32 %v999, %v1000
  %v1002 = vrot.slane %v1001, 1
  %v1003 = vadd.f32 %v1001, %v1002
  %1004 = vmatprep.subr.mxu0 0.0
  %1005 = vmatpush1.msra.mxu0 %v30
  %1006 = vmatprep.subr.mxu0 0.0
  %1007 = vmatpush1.msra.mxu0 %v31
  %1008 = vmatprep.subr.mxu0 0.0
  %1009 = vmatpush1.msra.mxu0 %v32
  %1010 = vmatprep.subr.mxu0 0.0
  %1011 = vmatpush1.msra.mxu0 %v33
  %1012 = vmatprep.subr.mxu0 0.0
  %1013 = vmatpush1.msra.mxu0 %v34
  %1014 = vmatprep.subr.mxu0 0.0
  %1015 = vmatpush1.msra.mxu0 %v35
  %1016 = vmatprep.subr.mxu0 0.0
  %1017 = vmatpush1.msra.mxu0 %v36
  %1018 = vmatprep.subr.mxu0 0.0
  %1019 = vmatpush1.msra.mxu0 %v37
  %1020 = vmatprep.subr.mxu0 0.0
  %1021 = vmatpush1.msra.mxu0 %v38
  %1022 = vmatprep.subr.mxu0 0.0
  %1023 = vmatpush1.msra.mxu0 %v39
  %1024 = vmatprep.subr.mxu0 0.0
  %1025 = vmatpush1.msra.mxu0 %v40
  %1026 = vmatprep.subr.mxu0 0.0
  %1027 = vmatpush1.msra.mxu0 %v41
  %1028 = vmatprep.subr.mxu0 0.0
  %1029 = vmatpush1.msra.mxu0 %v42
  %1030 = vmatprep.subr.mxu0 0.0
  %1031 = vmatpush1.msra.mxu0 %v43
  %1032 = vmatprep.subr.mxu0 0.0
  %1033 = vmatpush1.msra.mxu0 %v44
  %1034 = vmatprep.subr.mxu0 0.0
  %1035 = vmatpush1.msra.mxu0 %v45
  %1036 = vmatprep.subr.mxu0 0.0
  %1037 = vmatpush1.msra.mxu0 0.0
  %1038 = vmatprep.subr.mxu0 0.0
  %1039 = vmatpush1.msra.mxu0 0.0
  %1040 = vmatprep.subr.mxu0 0.0
  %1041 = vmatpush1.msra.mxu0 0.0
  %1042 = vmatprep.subr.mxu0 0.0
  %1043 = vmatpush1.msra.mxu0 0.0
  %1044 = vmatprep.subr.mxu0 0.0
  %1045 = vmatpush1.msra.mxu0 0.0
  %1046 = vmatprep.subr.mxu0 0.0
  %1047 = vmatpush1.msra.mxu0 0.0
  %1048 = vmatprep.subr.mxu0 0.0
  %1049 = vmatpush1.msra.mxu0 0.0
  %1050 = vmatprep.subr.mxu0 0.0
  %1051 = vmatpush1.msra.mxu0 0.0
  %1052 = vmatprep.subr.mxu0 0.0
  %1053 = vmatpush1.msra.mxu0 0.0
  %1054 = vmatprep.subr.mxu0 0.0
  %1055 = vmatpush1.msra.mxu0 0.0
  %1056 = vmatprep.subr.mxu0 0.0
  %1057 = vmatpush1.msra.mxu0 0.0
  %1058 = vmatprep.subr.mxu0 0.0
  %1059 = vmatpush1.msra.mxu0 0.0
  %1060 = vmatprep.subr.mxu0 0.0
  %1061 = vmatpush1.msra.mxu0 0.0
  %1062 = vmatprep.subr.mxu0 0.0
  %1063 = vmatpush1.msra.mxu0 0.0
  %1064 = vmatprep.subr.mxu0 0.0
  %1065 = vmatpush1.msra.mxu0 0.0
  %1066 = vmatprep.subr.mxu0 0.0
  %1067 = vmatpush1.msra.mxu0 0.0
  %1068 = vmatprep.mubr.f32.mxu0 0.0
  %1069 = vmatmul.mubr.f32.gmra.mrb[0].mxu0 %v1003
  %v1070 = vpop.f32.mrb[0].mxu0
  %v1071 = vadd.f32 0.0, %v1070
  %v1072 = vpop.f32.mrb[0].mxu0
  %1073 = vdwg.mxu0
  %v1074 = vmul.f32 %v1071, 0.001953125
  %v1075 = vlaneseq
  %v1076 = vshrl.u32 %v1075, 7
  %v1077 = vsub.s32 0, %v1076
  %v1078 = vrot.slane %v1074, %v1077
  %v1079 = vsub.f32 %v991, %v1078
  %v1080 = vsub.f32 %v992, %v1078
  %v1081 = vsub.f32 %v993, %v1078
  %v1082 = vsub.f32 %v994, %v1078
  %v1083 = vmul.f32 %v1079, %v1079
  %v1084 = vmul.f32 %v1080, %v1080
  %v1085 = vmul.f32 %v1081, %v1081
  %v1086 = vmul.f32 %v1082, %v1082
  %v1087 = vadd.f32 %v1083, %v1084
  %v1088 = vadd.f32 %v1087, %v1085
  %v1089 = vadd.f32 %v1088, %v1086
  %v1090 = vrot.slane %v1089, 4
  %v1091 = vadd.f32 %v1089, %v1090
  %v1092 = vrot.slane %v1091, 2
  %v1093 = vadd.f32 %v1091, %v1092
  %v1094 = vrot.slane %v1093, 1
  %v1095 = vadd.f32 %v1093, %v1094
  %1096 = vmatprep.subr.mxu0 0.0
  %1097 = vmatpush1.msra.mxu0 %v30
  %1098 = vmatprep.subr.mxu0 0.0
  %1099 = vmatpush1.msra.mxu0 %v31
  %1100 = vmatprep.subr.mxu0 0.0
  %1101 = vmatpush1.msra.mxu0 %v32
  %1102 = vmatprep.subr.mxu0 0.0
  %1103 = vmatpush1.msra.mxu0 %v33
  %1104 = vmatprep.subr.mxu0 0.0
  %1105 = vmatpush1.msra.mxu0 %v34
  %1106 = vmatprep.subr.mxu0 0.0
  %1107 = vmatpush1.msra.mxu0 %v35
  %1108 = vmatprep.subr.mxu0 0.0
  %1109 = vmatpush1.msra.mxu0 %v36
  %1110 = vmatprep.subr.mxu0 0.0
  %1111 = vmatpush1.msra.mxu0 %v37
  %1112 = vmatprep.subr.mxu0 0.0
  %1113 = vmatpush1.msra.mxu0 %v38
  %1114 = vmatprep.subr.mxu0 0.0
  %1115 = vmatpush1.msra.mxu0 %v39
  %1116 = vmatprep.subr.mxu0 0.0
  %1117 = vmatpush1.msra.mxu0 %v40
  %1118 = vmatprep.subr.mxu0 0.0
  %1119 = vmatpush1.msra.mxu0 %v41
  %1120 = vmatprep.subr.mxu0 0.0
  %1121 = vmatpush1.msra.mxu0 %v42
  %1122 = vmatprep.subr.mxu0 0.0
  %1123 = vmatpush1.msra.mxu0 %v43
  %1124 = vmatprep.subr.mxu0 0.0
  %1125 = vmatpush1.msra.mxu0 %v44
  %1126 = vmatprep.subr.mxu0 0.0
  %1127 = vmatpush1.msra.mxu0 %v45
  %1128 = vmatprep.subr.mxu0 0.0
  %1129 = vmatpush1.msra.mxu0 0.0
  %1130 = vmatprep.subr.mxu0 0.0
  %1131 = vmatpush1.msra.mxu0 0.0
  %1132 = vmatprep.subr.mxu0 0.0
  %1133 = vmatpush1.msra.mxu0 0.0
  %1134 = vmatprep.subr.mxu0 0.0
  %1135 = vmatpush1.msra.mxu0 0.0
  %1136 = vmatprep.subr.mxu0 0.0
  %1137 = vmatpush1.msra.mxu0 0.0
  %1138 = vmatprep.subr.mxu0 0.0
  %1139 = vmatpush1.msra.mxu0 0.0
  %1140 = vmatprep.subr.mxu0 0.0
  %1141 = vmatpush1.msra.mxu0 0.0
  %1142 = vmatprep.subr.mxu0 0.0
  %1143 = vmatpush1.msra.mxu0 0.0
  %1144 = vmatprep.subr.mxu0 0.0
  %1145 = vmatpush1.msra.mxu0 0.0
  %1146 = vmatprep.subr.mxu0 0.0
  %1147 = vmatpush1.msra.mxu0 0.0
  %1148 = vmatprep.subr.mxu0 0.0
  %1149 = vmatpush1.msra.mxu0 0.0
  %1150 = vmatprep.subr.mxu0 0.0
  %1151 = vmatpush1.msra.mxu0 0.0
  %1152 = vmatprep.subr.mxu0 0.0
  %1153 = vmatpush1.msra.mxu0 0.0
  %1154 = vmatprep.subr.mxu0 0.0
  %1155 = vmatpush1.msra.mxu0 0.0
  %1156 = vmatprep.subr.mxu0 0.0
  %1157 = vmatpush1.msra.mxu0 0.0
  %1158 = vmatprep.subr.mxu0 0.0
  %1159 = vmatpush1.msra.mxu0 0.0
  %1160 = vmatprep.mubr.f32.mxu0 0.0
  %1161 = vmatmul.mubr.f32.gmra.mrb[0].mxu0 %v1095
  %v1162 = vpop.f32.mrb[0].mxu0
  %v1163 = vadd.f32 0.0, %v1162
  %v1164 = vpop.f32.mrb[0].mxu0
  %1165 = vdwg.mxu0
  %v1166 = vmul.f32 %v1163, 0.001953125
  %v1167 = vadd.f32 %v1166, 1e-05
  %v1168 = vrsqrt.pop %v1167
  %v1169 = vmul.f32 %v630, %v1168
  %v1171 = vlaneseq
  %v1172 = vshrl.u32 %v1171, 7
  %v1173 = vsub.s32 0, %v1172
  %v1174 = vrot.slane %v1169, %v1173
  %v1176 = vmul.f32 %v1079, %v1174
  %v1177 = vmul.f32 %v1080, %v1174
  %v1178 = vmul.f32 %v1081, %v1174
  %v1179 = vmul.f32 %v1082, %v1174
  %v1181 = vlaneseq
  %v1182 = vshrl.u32 %v1181, 7
  %v1183 = vsub.s32 0, %v1182
  %v1184 = vrot.slane %v631, %v1183
  %v1186 = vadd.f32 %v1176, %v1184
  %v1187 = vadd.f32 %v1177, %v1184
  %v1188 = vadd.f32 %v1178, %v1184
  %v1189 = vadd.f32 %v1179, %v1184
  %v1190 = vmax.f32 %v1186, 0.0
  %v1191 = vmax.f32 %v1187, 0.0
  %v1192 = vmax.f32 %v1188, 0.0
  %v1193 = vmax.f32 %v1189, 0.0
  %1194 = vst [vmem:[%s8] sm:$0xff] %v1190
  %1195 = vst [vmem:[%s8 + $0x8] sm:$0xff] %v1191
  %1196 = vst [vmem:[%s8 + $0x10] sm:$0xff] %v1192
  %1197 = vst [vmem:[%s8 + $0x18] sm:$0xff] %v1193
  // Predicated region
  $region34: #{cnn_block_forward.1} parent=0 // pred_check
    _
  $region35: #{cnn_block_forward.1} parent=0 // pred_check_branch
    %1199 = sbr.rel (0) target = $region37
  $region36: #{cnn_block_forward.1} parent=0 // pred_region
    _
  $region37: #{cnn_block_forward.1} parent=0 // pred_fallthru
    _
  // Predicated region
  $region38: #{cnn_block_forward.1} parent=0 // pred_check
    _
  $region39: #{cnn_block_forward.1} parent=0 // pred_check_branch
    %1201 = sbr.rel (0) target = $region41
  $region40: #{cnn_block_forward.1} parent=0 // pred_region
    _
  $region41: #{cnn_block_forward.1} parent=0 // pred_fallthru
    _

</llo_original>
